<compile_context>
chip_gen: v7x
topology: tpu7x:2x2x1
jax: 0.10.0
libtpu: 0.0.40
codegen_flags: <defaults>
</compile_context>

<pallas_src>
import numpy as np
import jax
import jax.numpy as jnp
from jax import lax
from jax.experimental import pallas as pl
from jax.experimental.pallas import tpu as pltpu

# --- static hyperparameters (args.*) ------------------------------------------
T_PARAM = 0.1        # args.t
ALFA = 2             # args.alfa == 2 -> weight = r*r (exact square, no pow NaN)
LAMBDA_1 = 0.5       # args.lambda_1
PSEUDO_THRESH = 0.95
VMEM_LIMIT = 48 * 1024 * 1024   # safe on v7x (64 MiB); v5e/v6e could go higher


# --- Kernel A: fused GCN  out = L2norm((adj @ x) @ W + b), dual f32/bf16 output -
def _gcn_fused_kernel(adj_ref, x_ref, w_ref, b_ref, o32_ref, o16_ref, acc_ref):
    k = pl.program_id(2)
    tk = adj_ref.shape[1]

    @pl.when(k == 0)
    def _():
        acc_ref[...] = jnp.zeros_like(acc_ref)

    koff = pl.multiple_of(k * tk, tk)
    # contract adj tile against the VMEM-resident x slab (width F) -> f32 acc
    acc_ref[...] += jnp.dot(adj_ref[...], x_ref[pl.ds(koff, tk), :],
                            preferred_element_type=jnp.float32)

    @pl.when(k == pl.num_programs(2) - 1)
    def _():
        # small (tm, F) @ (F, H) matmul + bias; then row L2 normalization
        h = jnp.dot(acc_ref[...].astype(jnp.bfloat16), w_ref[...],
                    preferred_element_type=jnp.float32)
        out = h + b_ref[...]
        inv = lax.rsqrt(jnp.sum(out * out, axis=1, keepdims=True) + 1e-12)
        y = out * inv
        o32_ref[...] = y
        o16_ref[...] = y.astype(jnp.bfloat16)


def gcn_fused(adj_bf, x_bf, w_bf, b, *, tm=256, tk=256):
    # adj_bf: [G,N,N] bf16, x_bf: [G,N,F] bf16, w_bf: [G,F,H] bf16, b: [G,1,H] f32
    # returns (x_all_f32 [N, G*H], x_all_bf16 [N, G*H]); torch.cat fused via out index.
    G, N, _ = adj_bf.shape
    F = x_bf.shape[2]
    H = w_bf.shape[2]
    tm = min(tm, N)
    tk = min(tk, N)
    flops = 2 * G * N * N * F + 2 * G * N * F * H
    bytes_accessed = (adj_bf.size * 2 + x_bf.size * 2 + w_bf.size * 2
                      + b.size * 4 + N * G * H * (4 + 2))
    return pl.pallas_call(
        _gcn_fused_kernel,
        out_shape=(jax.ShapeDtypeStruct((N, G * H), jnp.float32),
                   jax.ShapeDtypeStruct((N, G * H), jnp.bfloat16)),
        grid=(G, N // tm, N // tk),
        in_specs=[
            pl.BlockSpec((None, tm, tk), lambda g, i, k: (g, i, k)),   # adj streams
            pl.BlockSpec((None, N, F), lambda g, i, k: (g, 0, 0)),     # x resident
            pl.BlockSpec((None, F, H), lambda g, i, k: (g, 0, 0)),     # W resident
            pl.BlockSpec((None, 1, H), lambda g, i, k: (g, 0, 0)),     # b resident
        ],
        out_specs=(pl.BlockSpec((tm, H), lambda g, i, k: (i, g)),
                   pl.BlockSpec((tm, H), lambda g, i, k: (i, g))),
        scratch_shapes=[pltpu.VMEM((tm, F), jnp.float32)],
        compiler_params=pltpu.CompilerParams(
            dimension_semantics=("parallel", "parallel", "arbitrary"),
            vmem_limit_bytes=VMEM_LIMIT),
        cost_estimate=pl.CostEstimate(flops=flops, transcendentals=G * N,
                                      bytes_accessed=bytes_accessed),
    )(adj_bf, x_bf, w_bf, b)


# --- Kernel B: thresholded strict-upper cosine mask (int8) ----------------------
def _cos_mask_kernel(a_ref, b_ref, o_ref):
    i = pl.program_id(0)
    j = pl.program_id(1)

    def _sim():
        # rows of x_all have L2 norm sqrt(2) -> cosine = 0.5 * <x_i, x_j>
        return 0.5 * lax.dot_general(
            a_ref[...], b_ref[...],
            dimension_numbers=(((1,), (1,)), ((), ())),
            preferred_element_type=jnp.float32)

    @pl.when(j < i)
    def _():
        # strictly-lower blocks: zero, no matmul (b block reuses previous fetch)
        o_ref[...] = jnp.zeros_like(o_ref)

    @pl.when(j > i)
    def _():
        o_ref[...] = jnp.where(_sim() > PSEUDO_THRESH, 1.0, 0.0).astype(jnp.int8)

    @pl.when(j == i)
    def _():
        sim = _sim()
        ti, tj = o_ref.shape
        row = i * ti + lax.broadcasted_iota(jnp.int32, (ti, tj), 0)
        col = j * tj + lax.broadcasted_iota(jnp.int32, (ti, tj), 1)
        hit = jnp.logical_and(sim > PSEUDO_THRESH, col > row)   # strict upper
        o_ref[...] = jnp.where(hit, 1.0, 0.0).astype(jnp.int8)


def cos_mask(x_bf, *, ti=256, tj=256):
    N, D = x_bf.shape
    ti = min(ti, N)
    tj = min(tj, N)
    flops = 2 * N * N * D
    bytes_accessed = 2 * N * D * 2 + N * N * 1
    return pl.pallas_call(
        _cos_mask_kernel,
        out_shape=jax.ShapeDtypeStruct((N, N), jnp.int8),
        grid=(N // ti, N // tj),
        in_specs=[
            pl.BlockSpec((ti, D), lambda i, j: (i, 0)),
            # lower-tri steps map the b block to the already-fetched row block
            pl.BlockSpec((tj, D), lambda i, j: (jnp.maximum(i, j), 0)),
        ],
        out_specs=pl.BlockSpec((ti, tj), lambda i, j: (i, j)),
        compiler_params=pltpu.CompilerParams(
            dimension_semantics=("parallel", "parallel"),
            vmem_limit_bytes=VMEM_LIMIT),
        cost_estimate=pl.CostEstimate(flops=flops, transcendentals=0,
                                      bytes_accessed=bytes_accessed),
    )(x_bf, x_bf)


# --- Kernel C: bpr_loss2 (tiled, bf16-streamed, deferred scalar reduce) ---------
def _bpr2_kernel(s_ref, e_ref, n_ref, w_ref, o_ref, acc_ref):
    i = pl.program_id(0)

    @pl.when(i == 0)
    def _():
        acc_ref[...] = jnp.zeros_like(acc_ref)

    eps2 = 1e-16
    s = s_ref[...].astype(jnp.float32)
    e = e_ref[...].astype(jnp.float32)
    ng = n_ref[...].astype(jnp.float32)

    def _row_cos(a, b):
        num = jnp.sum(a * b, axis=1, keepdims=True)
        inv_a = lax.rsqrt(jnp.maximum(jnp.sum(a * a, axis=1, keepdims=True), eps2))
        inv_b = lax.rsqrt(jnp.maximum(jnp.sum(b * b, axis=1, keepdims=True), eps2))
        return num * inv_a * inv_b

    pos = _row_cos(s, e)
    neg = _row_cos(s, ng)
    r = (pos - T_PARAM) / (1.0 - T_PARAM)
    weight = r * r                                   # alfa == 2: exact square
    second = jnp.log(1.0 + jnp.exp(neg - pos))
    # per-row contributions; the cross-sublane reduce is deferred to finalize
    acc_ref[...] += weight * second * w_ref[...]

    @pl.when(i == pl.num_programs(0) - 1)
    def _():
        o_ref[...] = jnp.sum(acc_ref[...]).reshape(1, 1)


def bpr_loss2(s_emb, e_emb, neg, pair_w, *, tp=256):
    # TODO(synk): on v7x add a leading size-2 "parallel" grid axis so both
    # TensorCores share this reduction; kept single-axis here (K-C is tiny).
    P, D = s_emb.shape
    Pp = ((P + tp - 1) // tp) * tp
    pad = Pp - P

    def _pad2(a):
        return jnp.pad(a, ((0, pad), (0, 0)))

    w = jnp.pad(pair_w.reshape(-1, 1).astype(jnp.float32), ((0, pad), (0, 0)))
    out = pl.pallas_call(
        _bpr2_kernel,
        out_shape=jax.ShapeDtypeStruct((1, 1), jnp.float32),
        grid=(Pp // tp,),
        in_specs=[
            pl.BlockSpec((tp, D), lambda i: (i, 0)),
            pl.BlockSpec((tp, D), lambda i: (i, 0)),
            pl.BlockSpec((tp, D), lambda i: (i, 0)),
            pl.BlockSpec((tp, 1), lambda i: (i, 0)),
        ],
        out_specs=pl.BlockSpec((1, 1), lambda i: (0, 0)),
        scratch_shapes=[pltpu.VMEM((tp, 1), jnp.float32)],
        compiler_params=pltpu.CompilerParams(
            dimension_semantics=("arbitrary",),
            vmem_limit_bytes=VMEM_LIMIT),
    )(_pad2(s_emb).astype(jnp.bfloat16), _pad2(e_emb).astype(jnp.bfloat16),
      _pad2(neg).astype(jnp.bfloat16), w)
    return out[0, 0]


# --- GNN.forward ----------------------------------------------------------------
def gnn_forward(params, x0, adj0, x1, adj1, trainset, key, *, k_max=1024):
    N = x0.shape[0]

    # Both GCN branches stacked on a leading graph axis; bf16 matmul operands.
    x_stack = jnp.stack([x0, x1]).astype(jnp.bfloat16)            # [2, N, F]
    w_stack = jnp.stack([params["w0"], params["w1"]]).astype(jnp.bfloat16)
    b_stack = jnp.stack([params["b0"], params["b1"]])             # [2, 1, H] f32
    adj_stack = jnp.stack([adj0, adj1]).astype(jnp.bfloat16)      # [2, N, N]

    # fused (adj @ x) @ W + b, row-L2-norm, concat; dual f32 / bf16 outputs
    x_all, x_all_bf = gcn_fused(adj_stack, x_stack, w_stack, b_stack)

    # TODO(synk): lc_loss relies on python random-walk neighbor sampling and the
    # external Contrast_L class (not defined in the module); contribution set to 0.
    lc_loss = jnp.float32(0.0)

    # real supervision pairs
    real = trainset.T
    n_real = real.shape[1]
    r_s_emb = x_all_bf[real[0]]
    r_e_emb = x_all_bf[real[1]]
    k0, k1 = jax.random.split(key)
    # range [0, N-2]: matches torch's random.sample(range(0, len(x_all)-1), ...)
    neg_idx0 = jax.random.choice(k0, N - 1, (n_real,), replace=False)
    neg_r = x_all_bf[neg_idx0]

    # pseudo pairs from the thresholded strict-upper cosine mask (stays on device;
    # static cap k_max replaces torch.nonzero().tolist() so shapes never change).
    mask = cos_mask(x_all_bf)                                     # [N, N] int8
    start, end = jnp.nonzero(mask, size=k_max, fill_value=0)
    n_pseudo = jnp.sum(mask.astype(jnp.int32))
    pseudo_valid = (jnp.arange(k_max) < n_pseudo).astype(jnp.float32)
    p_s_emb = x_all_bf[start]
    p_e_emb = x_all_bf[end]
    # range [0, N-2]: matches torch's np.random.choice(range(0, len(x_all)-1), ...)
    neg_idx1 = jax.random.randint(k1, (k_max,), 0, N - 1)
    neg_p = x_all_bf[neg_idx1]

    s_emb = jnp.concatenate([r_s_emb, p_s_emb], axis=0)
    e_emb = jnp.concatenate([r_e_emb, p_e_emb], axis=0)
    neg = jnp.concatenate([neg_r, neg_p], axis=0)
    pair_w = jnp.concatenate([jnp.ones((n_real,), jnp.float32), pseudo_valid])

    loss_label = bpr_loss2(s_emb, e_emb, neg, pair_w)
    return x_all, loss_label + LAMBDA_1 * lc_loss


# --- deterministic parameter / input construction --------------------------------
def make_params(key, fin, hidden):
    k0, k1, k2, k3 = jax.random.split(key, 4)
    stdv = 1.0 / np.sqrt(hidden)
    return {
        "w0": jax.random.uniform(k0, (fin, hidden), jnp.float32, -stdv, stdv),
        "b0": jax.random.uniform(k1, (1, hidden), jnp.float32, -stdv, stdv),
        "w1": jax.random.uniform(k2, (fin, hidden), jnp.float32, -stdv, stdv),
        "b1": jax.random.uniform(k3, (1, hidden), jnp.float32, -stdv, stdv),
    }


def make_adj(key, n):
    a = (jax.random.uniform(key, (n, n)) > 0.95).astype(jnp.float32)
    a = jnp.clip(a + a.T, 0.0, 1.0) + jnp.eye(n, dtype=jnp.float32)
    deg = jnp.sum(a, axis=1, keepdims=True)
    return a / deg   # row-normalized dense adjacency


if __name__ == "__main__":
    N = 256       # graph nodes (multiple of the 256-row tile after min() clamp)
    FIN = 64      # input feature dim
    HID = 128     # hidden dim (lane-aligned -> unmasked vector stores)
    P = 16        # real supervision pairs

    root = jax.random.PRNGKey(0)
    kp, kx0, kx1, ka0, ka1, kt, kfwd = jax.random.split(root, 7)

    params = make_params(kp, FIN, HID)
    x0 = jax.random.normal(kx0, (N, FIN), jnp.float32)
    x1 = jax.random.normal(kx1, (N, FIN), jnp.float32)
    adj0 = make_adj(ka0, N)
    adj1 = make_adj(ka1, N)
    trainset = jax.random.randint(kt, (P, 2), 0, N).astype(jnp.int32)

    x_all, loss = gnn_forward(params, x0, adj0, x1, adj1, trainset, kfwd)
    jax.block_until_ready(x_all)
    jax.block_until_ready(loss)
    assert x_all.shape == (N, 2 * HID)
    assert np.isfinite(float(loss))
    print("KERNEL_OK")
</pallas_src>

<mosaic_0001>
module attributes {stable_mosaic.version = 11 : i64} {
  func.func @_gcn_fused_kernel(%arg0: i32, %arg1: i32, %arg2: i32, %arg3: memref<1x256x256xbf16, #tpu.memory_space<vmem>>, %arg4: memref<1x256x64xbf16, #tpu.memory_space<vmem>>, %arg5: memref<1x64x128xbf16, #tpu.memory_space<vmem>>, %arg6: memref<1x1x128xf32, #tpu.memory_space<vmem>>, %arg7: memref<256x128xf32, #tpu.memory_space<vmem>>, %arg8: memref<256x128xbf16, #tpu.memory_space<vmem>>, %arg9: memref<256x64xf32, #tpu.memory_space<vmem>>) attributes {dimension_semantics = [#tpu.dimension_semantics<parallel>, #tpu.dimension_semantics<parallel>, #tpu.dimension_semantics<arbitrary>], iteration_bounds = array<i64: 2, 1, 1>, scalar_prefetch = 0 : i64, scratch_operands = 1 : i64, tpu.core_type = #tpu.core_type<tc>, window_params = [{transform_indices = @transform_0, window_bounds = array<i64: 1, 256, 256>}, {transform_indices = @transform_1, window_bounds = array<i64: 1, 256, 64>}, {transform_indices = @transform_2, window_bounds = array<i64: 1, 64, 128>}, {transform_indices = @transform_3, window_bounds = array<i64: 1, 1, 128>}, {transform_indices = @transform_4, window_bounds = array<i64: 256, 128>}, {transform_indices = @transform_5, window_bounds = array<i64: 256, 128>}]} {
    %c0_i32 = arith.constant 0 : i32
    %0 = arith.cmpi eq, %arg2, %c0_i32 : i32
    %1 = arith.extui %0 : i1 to i32
    %c0_i32_0 = arith.constant 0 : i32
    %2 = arith.cmpi ne, %1, %c0_i32_0 : i32
    scf.if %2 {
      %cst_11 = arith.constant 0.000000e+00 : f32
      %17 = vector.broadcast %cst_11 : f32 to vector<256x64xf32>
      %c0_12 = arith.constant 0 : index
      %c0_13 = arith.constant 0 : index
      %18 = vector.load %arg9[%c0_12, %c0_13] : memref<256x64xf32, #tpu.memory_space<vmem>>, vector<256x64xf32>
      tpu.vector_store %arg9[%c0_12, %c0_13], %17 {strides = array<i32>} : memref<256x64xf32, #tpu.memory_space<vmem>>, vector<256x64xf32>,
    } else {
    }
    %c256_i32 = arith.constant 256 : i32
    %3 = arith.muli %arg2, %c256_i32 : i32
    %4 = tpu.assume_multiple %3, 256 : i32
    %c0 = arith.constant 0 : index
    %c0_1 = arith.constant 0 : index
    %5 = vector.load %arg9[%c0, %c0_1] : memref<256x64xf32, #tpu.memory_space<vmem>>, vector<256x64xf32>
    %c0_2 = arith.constant 0 : index
    %c0_3 = arith.constant 0 : index
    %c0_4 = arith.constant 0 : index
    %6 = vector.load %arg3[%c0_2, %c0_3, %c0_4] : memref<1x256x256xbf16, #tpu.memory_space<vmem>>, vector<1x256x256xbf16>
    %7 = vector.shape_cast %6 : vector<1x256x256xbf16> to vector<256x256xbf16>
    %c0_5 = arith.constant 0 : index
    %8 = arith.index_cast %4 : i32 to index
    %c0_6 = arith.constant 0 : index
    %9 = vector.load %arg4[%c0_5, %8, %c0_6] : memref<1x256x64xbf16, #tpu.memory_space<vmem>>, vector<1x256x64xbf16>
    %10 = vector.shape_cast %9 : vector<1x256x64xbf16> to vector<256x64xbf16>
    %cst = arith.constant dense<0.000000e+00> : vector<256x64xf32>
    %11 = tpu.matmul %7, %10, %cst {dimension_numbers = #tpu.dot_dimension_numbers<[1], [0], [0], [1], [0, 0, 1, 1], [], []>} : vector<256x256xbf16>, vector<256x64xbf16>, vector<256x64xf32> -> vector<256x64xf32>
    %12 = arith.addf %5, %11 : vector<256x64xf32>
    %c0_7 = arith.constant 0 : index
    %c0_8 = arith.constant 0 : index
    %13 = vector.load %arg9[%c0_7, %c0_8] : memref<256x64xf32, #tpu.memory_space<vmem>>, vector<256x64xf32>
    tpu.vector_store %arg9[%c0_7, %c0_8], %12 {strides = array<i32>} : memref<256x64xf32, #tpu.memory_space<vmem>>, vector<256x64xf32>,
    %c0_i32_9 = arith.constant 0 : i32
    %14 = arith.cmpi eq, %arg2, %c0_i32_9 : i32
    %15 = arith.extui %14 : i1 to i32
    %c0_i32_10 = arith.constant 0 : i32
    %16 = arith.cmpi ne, %15, %c0_i32_10 : i32
    scf.if %16 {
      %c0_11 = arith.constant 0 : index
      %c0_12 = arith.constant 0 : index
      %17 = vector.load %arg9[%c0_11, %c0_12] : memref<256x64xf32, #tpu.memory_space<vmem>>, vector<256x64xf32>
      %18 = arith.truncf %17 : vector<256x64xf32> to vector<256x64xbf16>
      %c0_13 = arith.constant 0 : index
      %c0_14 = arith.constant 0 : index
      %c0_15 = arith.constant 0 : index
      %19 = vector.load %arg5[%c0_13, %c0_14, %c0_15] : memref<1x64x128xbf16, #tpu.memory_space<vmem>>, vector<1x64x128xbf16>
      %20 = vector.shape_cast %19 : vector<1x64x128xbf16> to vector<64x128xbf16>
      %cst_16 = arith.constant dense<0.000000e+00> : vector<256x128xf32>
      %21 = tpu.matmul %18, %20, %cst_16 {dimension_numbers = #tpu.dot_dimension_numbers<[1], [0], [0], [1], [0, 0, 1, 1], [], []>} : vector<256x64xbf16>, vector<64x128xbf16>, vector<256x128xf32> -> vector<256x128xf32>
      %c0_17 = arith.constant 0 : index
      %c0_18 = arith.constant 0 : index
      %c0_19 = arith.constant 0 : index
      %22 = vector.load %arg6[%c0_17, %c0_18, %c0_19] : memref<1x1x128xf32, #tpu.memory_space<vmem>>, vector<1x1x128xf32>
      %23 = vector.shape_cast %22 : vector<1x1x128xf32> to vector<1x128xf32>
      %24 = vector.broadcast %23 : vector<1x128xf32> to vector<256x128xf32>
      %25 = arith.addf %21, %24 : vector<256x128xf32>
      %26 = arith.mulf %25, %25 : vector<256x128xf32>
      %cst_20 = arith.constant dense<0.000000e+00> : vector<256xf32>
      %27 = vector.multi_reduction <add>, %26, %cst_20 [1] : vector<256x128xf32> to vector<256xf32>
      %28 = vector.shape_cast %27 : vector<256xf32> to vector<256x1xf32>
      %cst_21 = arith.constant 9.99999996E-13 : f32
      %29 = vector.broadcast %cst_21 : f32 to vector<256x1xf32>
      %30 = arith.addf %28, %29 : vector<256x1xf32>
      %31 = math.rsqrt %30 : vector<256x1xf32>
      %32 = vector.broadcast %31 : vector<256x1xf32> to vector<256x128xf32>
      %33 = arith.mulf %25, %32 : vector<256x128xf32>
      %c0_22 = arith.constant 0 : index
      %c0_23 = arith.constant 0 : index
      %34 = vector.load %arg7[%c0_22, %c0_23] : memref<256x128xf32, #tpu.memory_space<vmem>>, vector<256x128xf32>
      tpu.vector_store %arg7[%c0_22, %c0_23], %33 {strides = array<i32>} : memref<256x128xf32, #tpu.memory_space<vmem>>, vector<256x128xf32>,
      %35 = arith.truncf %33 : vector<256x128xf32> to vector<256x128xbf16>
      %c0_24 = arith.constant 0 : index
      %c0_25 = arith.constant 0 : index
      %36 = vector.load %arg8[%c0_24, %c0_25] : memref<256x128xbf16, #tpu.memory_space<vmem>>, vector<256x128xbf16>
      tpu.vector_store %arg8[%c0_24, %c0_25], %35 {strides = array<i32>} : memref<256x128xbf16, #tpu.memory_space<vmem>>, vector<256x128xbf16>,
    } else {
    }
    return
  }
  func.func @transform_0(%arg0: i32, %arg1: i32, %arg2: i32) -> (i32, i32, i32) {
    %c0_i32 = arith.constant 0 : i32
    return %arg0, %arg1, %arg2 : i32, i32, i32
  }
  func.func @transform_1(%arg0: i32, %arg1: i32, %arg2: i32) -> (i32, i32, i32) {
    %c0_i32 = arith.constant 0 : i32
    %c0_i32_0 = arith.constant 0 : i32
    %c0_i32_1 = arith.constant 0 : i32
    return %arg0, %c0_i32, %c0_i32_0 : i32, i32, i32
  }
  func.func @transform_2(%arg0: i32, %arg1: i32, %arg2: i32) -> (i32, i32, i32) {
    %c0_i32 = arith.constant 0 : i32
    %c0_i32_0 = arith.constant 0 : i32
    %c0_i32_1 = arith.constant 0 : i32
    return %arg0, %c0_i32, %c0_i32_0 : i32, i32, i32
  }
  func.func @transform_3(%arg0: i32, %arg1: i32, %arg2: i32) -> (i32, i32, i32) {
    %c0_i32 = arith.constant 0 : i32
    %c0_i32_0 = arith.constant 0 : i32
    %c0_i32_1 = arith.constant 0 : i32
    return %arg0, %c0_i32, %c0_i32_0 : i32, i32, i32
  }
  func.func @transform_4(%arg0: i32, %arg1: i32, %arg2: i32) -> (i32, i32) {
    %c0_i32 = arith.constant 0 : i32
    return %arg1, %arg0 : i32, i32
  }
  func.func @transform_5(%arg0: i32, %arg1: i32, %arg2: i32) -> (i32, i32) {
    %c0_i32 = arith.constant 0 : i32
    return %arg1, %arg0 : i32, i32
  }
}

</mosaic_0001>

<llo_original>
// kernel: tpu_custom_call.1
$region0: #{tpu_custom_call.1}
  #allocation0 [shape = 'u32[]', space=smem, size = 0x4, offset = 0x4, fixed_abs, tag = 'smem constant byte address 0x4 - core index']
  #allocation1 [shape = 'u32[144,128]{1,0:T(1,128)}', space=vmem, size = 0x12000, scoped, tag = 'internal scratch']
  #allocation2 [shape = 'f32[256,64]{1,0:T(8,128)}', space=vmem, size = 0x20000, scoped, tag = 'scratch operand']
  %s0 = inlined_call_operand.hbm [shape: bf16[2,256,256], index: 0, kind: input, shape index: {}]
  %s1 = inlined_call_operand.vmem [shape: bf16[2,256,64], index: 1, kind: input, shape index: {}]
  %s2 = inlined_call_operand.vmem [shape: bf16[2,64,128], index: 2, kind: input, shape index: {}]
  %s3 = inlined_call_operand.vmem [shape: f32[2,1,128], index: 3, kind: input, shape index: {}]
  %s4 = inlined_call_operand.hbm [shape: f32[256,256], index: 4, kind: output, shape index: {0}]
  %s5 = inlined_call_operand.hbm [shape: bf16[256,256], index: 5, kind: output, shape index: {1}]
  %6 = xla_tuple %s4, %s5
  %s7 = sld [smem:[#allocation0]]
  $region69: #{tpu_custom_call.1} parent=0
    _
  %s9 = ssub.s32 1, %s7
  %s10 = scalar_select 0, %s9, %s7
  $region1: #{tpu_custom_call.1} parent=0
    #allocation3 [shape = 'u8[262144]{0}', space=vmem, size = 0x40000, scoped, tag = 'input window, operand 0']
    #allocation4 [shape = 's32[2]{0}', space=sflag, size = 0x8, scoped, tag = 'scoped memory for tpu_custom_call.1']
    #allocation5 [shape = 's32[2]{0}', space=sflag, size = 0x8, scoped, tag = 'scoped memory for tpu_custom_call.1']
    #allocation6 [shape = 'u8[262144]{0}', space=vmem, size = 0x40000, scoped, tag = 'output window, operand 0']
    #allocation7 [shape = 'u8[131072]{0}', space=vmem, size = 0x20000, scoped, tag = 'output window, operand 1']
    #allocation8 [shape = 's32[2]{0}', space=sflag, size = 0x8, scoped, tag = 'scoped memory for tpu_custom_call.1']
    %11 = vsyncpa [#allocation4], 0
    %s12 = scalar_lea.sflag [#allocation4], 1
    %13 = vsyncpa %s12, 0
    %14 = vsyncpa [#allocation5], 0
    %s15 = scalar_lea.sflag [#allocation5], 1
    %16 = vsyncpa %s15, 0
    %17 = vsyncpa [#allocation8], 0
    %s18 = scalar_lea.sflag [#allocation8], 1
    %19 = vsyncpa %s18, 0
    loop: start=0, step=1, limit=4
    $region2: #{tpu_custom_call.1} parent=1 // loop_pre_header
      _
    $region3: #{tpu_custom_call.1} parent=1 // loop_header
      %s21 = sphi 0, %s25
      %p22 = scmp.ge.s32.totalorder %s21, 4
      %s28 = sphi 0, %s47
      %s29 = sphi 0, %s43
      %s30 = sphi 0, %s39
      %s31 = sphi 0, %s28
      %s32 = sphi 0, %s29
      %s33 = sphi 0, %s30
      %s34 = sphi 0, %s31
      %s35 = sphi 0, %s32
      %s36 = sphi 0, %s33
      %s54 = sphi 0, %s56
      %s57 = sphi 0, %s54
      %s58 = sphi 0, %s57
      %s74 = sphi 0, %s58
      %s80 = sphi 0, %s82
      %s83 = sphi 0, %s80
      %s84 = sphi 0, %s83
      %s100 = sphi 0, %s84
      %s106 = sphi 0, %s108
      %s109 = sphi 0, %s106
      %s110 = sphi 0, %s109
      %s126 = sphi 0, %s110
      %s132 = sphi 0, %s134
      %s135 = sphi 0, %s132
      %s136 = sphi 0, %s135
      %s152 = sphi 0, %s136
      %s160 = sphi 0, %s162
      %s163 = sphi 0, %s160
      %s164 = sphi 0, %s163
      %s180 = sphi 0, %s164
      %s188 = sphi 0, %s190
      %s191 = sphi 0, %s188
      %s192 = sphi 0, %s191
      %s208 = sphi 0, %s192
    $region4: #{tpu_custom_call.1} parent=1 // loop_header_branch
      %24 = sbr.rel (%p22) target = $region8
    $region5: #{tpu_custom_call.1} parent=1 // loop_body
      %s26 = ssub.s32 %s21, 1
      %s27 = ssub.s32 %s21, 2
      %s37 = sadd.s32 1, %s30
      %p38 = scmp.ge.s32.totalorder %s37, 1
      %s39 = scalar_select %p38, 0, %s37
      %s40 = sadd.s32 1, %s29
      %s41 = scalar_select %p38, %s40, %s29
      %p42 = scmp.ge.s32.totalorder %s41, 1
      %s43 = scalar_select %p42, 0, %s41
      %s44 = sadd.s32 1, %s28
      %s45 = scalar_select %p42, %s44, %s28
      %p46 = scmp.ge.s32.totalorder %s45, 2
      %s47 = scalar_select %p46, 0, %s45
      %s48 = ssub.s32 %s28, %s47
      %s49 = ssub.s32 %s29, %s43
      %s50 = sor.u32 %s48, %s49
      %s51 = ssub.s32 %s30, %s39
      %s52 = sor.u32 %s50, %s51
      %p53 = scmp.eq.s32.totalorder %s52, 0
      %s55 = sadd.s32 %s54, 1
      %s56 = scalar_select %p53, %s54, %s55
      %p59 = pneg %p53
      %p60 = scmp.eq.s32.totalorder %s21, 1
      %p61 = por %p59, %p60
      %p62 = scmp.ne.s32.totalorder %s54, %s57
      %p63 = scmp.eq.s32.totalorder %s21, 0
      %p64 = por %p62, %p63
      %p65 = scmp.ne.s32.totalorder %s54, %s57
      %p66 = scmp.eq.s32.totalorder %s26, 1
      %p67 = por %p65, %p66
      %p68 = scmp.ne.s32.totalorder %s57, %s58
      %p69 = scmp.eq.s32.totalorder %s26, 0
      %p70 = por %p68, %p69
      %p71 = scmp.ne.s32.totalorder %s57, %s58
      %p72 = scmp.eq.s32.totalorder %s27, 1
      %p73 = por %p71, %p72
      %p75 = scmp.ne.s32.totalorder %s58, %s74
      %p76 = scmp.eq.s32.totalorder %s27, 0
      %p77 = por %p75, %p76
      %s78 = ssub.s32 %s28, %s47
      %p79 = scmp.eq.s32.totalorder %s78, 0
      %s81 = sadd.s32 %s80, 1
      %s82 = scalar_select %p79, %s80, %s81
      %p85 = pneg %p79
      %p86 = scmp.eq.s32.totalorder %s21, 1
      %p87 = por %p85, %p86
      %p88 = scmp.ne.s32.totalorder %s80, %s83
      %p89 = scmp.eq.s32.totalorder %s21, 0
      %p90 = por %p88, %p89
      %p91 = scmp.ne.s32.totalorder %s80, %s83
      %p92 = scmp.eq.s32.totalorder %s26, 1
      %p93 = por %p91, %p92
      %p94 = scmp.ne.s32.totalorder %s83, %s84
      %p95 = scmp.eq.s32.totalorder %s26, 0
      %p96 = por %p94, %p95
      %p97 = scmp.ne.s32.totalorder %s83, %s84
      %p98 = scmp.eq.s32.totalorder %s27, 1
      %p99 = por %p97, %p98
      %p101 = scmp.ne.s32.totalorder %s84, %s100
      %p102 = scmp.eq.s32.totalorder %s27, 0
      %p103 = por %p101, %p102
      %s104 = ssub.s32 %s28, %s47
      %p105 = scmp.eq.s32.totalorder %s104, 0
      %s107 = sadd.s32 %s106, 1
      %s108 = scalar_select %p105, %s106, %s107
      %p111 = pneg %p105
      %p112 = scmp.eq.s32.totalorder %s21, 1
      %p113 = por %p111, %p112
      %p114 = scmp.ne.s32.totalorder %s106, %s109
      %p115 = scmp.eq.s32.totalorder %s21, 0
      %p116 = por %p114, %p115
      %p117 = scmp.ne.s32.totalorder %s106, %s109
      %p118 = scmp.eq.s32.totalorder %s26, 1
      %p119 = por %p117, %p118
      %p120 = scmp.ne.s32.totalorder %s109, %s110
      %p121 = scmp.eq.s32.totalorder %s26, 0
      %p122 = por %p120, %p121
      %p123 = scmp.ne.s32.totalorder %s109, %s110
      %p124 = scmp.eq.s32.totalorder %s27, 1
      %p125 = por %p123, %p124
      %p127 = scmp.ne.s32.totalorder %s110, %s126
      %p128 = scmp.eq.s32.totalorder %s27, 0
      %p129 = por %p127, %p128
      %s130 = ssub.s32 %s28, %s47
      %p131 = scmp.eq.s32.totalorder %s130, 0
      %s133 = sadd.s32 %s132, 1
      %s134 = scalar_select %p131, %s132, %s133
      %p137 = pneg %p131
      %p138 = scmp.eq.s32.totalorder %s21, 1
      %p139 = por %p137, %p138
      %p140 = scmp.ne.s32.totalorder %s132, %s135
      %p141 = scmp.eq.s32.totalorder %s21, 0
      %p142 = por %p140, %p141
      %p143 = scmp.ne.s32.totalorder %s132, %s135
      %p144 = scmp.eq.s32.totalorder %s26, 1
      %p145 = por %p143, %p144
      %p146 = scmp.ne.s32.totalorder %s135, %s136
      %p147 = scmp.eq.s32.totalorder %s26, 0
      %p148 = por %p146, %p147
      %p149 = scmp.ne.s32.totalorder %s135, %s136
      %p150 = scmp.eq.s32.totalorder %s27, 1
      %p151 = por %p149, %p150
      %p153 = scmp.ne.s32.totalorder %s136, %s152
      %p154 = scmp.eq.s32.totalorder %s27, 0
      %p155 = por %p153, %p154
      %s156 = ssub.s32 %s29, %s43
      %s157 = ssub.s32 %s28, %s47
      %s158 = sor.u32 %s156, %s157
      %p159 = scmp.eq.s32.totalorder %s158, 0
      %s161 = sadd.s32 %s160, 1
      %s162 = scalar_select %p159, %s160, %s161
      %p165 = pneg %p159
      %p166 = scmp.eq.s32.totalorder %s21, 1
      %p167 = por %p165, %p166
      %p168 = scmp.ne.s32.totalorder %s160, %s163
      %p169 = scmp.eq.s32.totalorder %s21, 0
      %p170 = por %p168, %p169
      %p171 = scmp.ne.s32.totalorder %s160, %s163
      %p172 = scmp.eq.s32.totalorder %s26, 1
      %p173 = por %p171, %p172
      %p174 = scmp.ne.s32.totalorder %s163, %s164
      %p175 = scmp.eq.s32.totalorder %s26, 0
      %p176 = por %p174, %p175
      %p177 = scmp.ne.s32.totalorder %s163, %s164
      %p178 = scmp.eq.s32.totalorder %s27, 1
      %p179 = por %p177, %p178
      %p181 = scmp.ne.s32.totalorder %s164, %s180
      %p182 = scmp.eq.s32.totalorder %s27, 0
      %p183 = por %p181, %p182
      %s184 = ssub.s32 %s29, %s43
      %s185 = ssub.s32 %s28, %s47
      %s186 = sor.u32 %s184, %s185
      %p187 = scmp.eq.s32.totalorder %s186, 0
      %s189 = sadd.s32 %s188, 1
      %s190 = scalar_select %p187, %s188, %s189
      %p193 = pneg %p187
      %p194 = scmp.eq.s32.totalorder %s21, 1
      %p195 = por %p193, %p194
      %p196 = scmp.ne.s32.totalorder %s188, %s191
      %p197 = scmp.eq.s32.totalorder %s21, 0
      %p198 = por %p196, %p197
      %p199 = scmp.ne.s32.totalorder %s188, %s191
      %p200 = scmp.eq.s32.totalorder %s26, 1
      %p201 = por %p199, %p200
      %p202 = scmp.ne.s32.totalorder %s191, %s192
      %p203 = scmp.eq.s32.totalorder %s26, 0
      %p204 = por %p202, %p203
      %p205 = scmp.ne.s32.totalorder %s191, %s192
      %p206 = scmp.eq.s32.totalorder %s27, 1
      %p207 = por %p205, %p206
      %p209 = scmp.ne.s32.totalorder %s192, %s208
      %p210 = scmp.eq.s32.totalorder %s27, 0
      %p211 = por %p209, %p210
      %p212 = scmp.le.s32.totalorder 1, %s21
      %p213 = scmp.lt.s32.totalorder %s21, 3
      %p214 = pnand %p212, %p213
      %p215 = pneg %p214
      // Predicated region
      $region9: #{tpu_custom_call.1} parent=5 // pred_check
        _
      $region10: #{tpu_custom_call.1} parent=5 // pred_check_branch
        %217 = sbr.rel (%p214) target = $region12
      $region11: #{tpu_custom_call.1} parent=5 // pred_region
        %s218 = ssub.s32 %s21, 1
      $region12: #{tpu_custom_call.1} parent=5 // pred_fallthru
        _
      %p219 = scmp.lt.s32.totalorder %s21, 2
      // Predicated region
      $region13: #{tpu_custom_call.1} parent=5 // pred_check
        %p220 = pneg %p219
      $region14: #{tpu_custom_call.1} parent=5 // pred_check_branch
        %222 = sbr.rel (%p220) target = $region16
      $region15: #{tpu_custom_call.1} parent=5 // pred_region
        // Predicated region
        $region17: #{tpu_custom_call.1} parent=15 // pred_check
          %p223 = pneg %p64
        $region18: #{tpu_custom_call.1} parent=15 // pred_check_branch
          %225 = sbr.rel (%p223) target = $region20
        $region19: #{tpu_custom_call.1} parent=15 // pred_region
          %s226 = sand.u32 %s54, 1
          %s227 = scalar_lea.sflag [#allocation4], %s226
          %s228 = sand.u32 %s54, 1
          %s229 = smul.addr %s228, 256
          %s230 = scalar_lea.vmem [#allocation3], %s229
          %s231 = smul.u32 32, %s29
          %s232 = smul.u32 2, %s30
          %s234 = ssub.s32 4096, 4096
          %235 = vsyncadd %s227, %s234
          %s236 = smul.addr %s231, 2
          %s237 = sadd.s32 %s232, %s236
          %s238 = smul.addr %s28, 64
          %s239 = sadd.s32 %s237, %s238
          %s240 = smul.addr %s239, 64
          %s241 = scalar_lea.hbm %s0, %s240
          %s242 = sshll.u32 %s230, 4
          %s243 = int_to_ptr.vmem [resolvable:$true] %s242
          %248 = dma.hbm_to_vmem [thread:$0]  %s241, 4096, %s243, %s227, 128, 128, 8
        $region20: #{tpu_custom_call.1} parent=15 // pred_fallthru
          _
        // Predicated region
        $region21: #{tpu_custom_call.1} parent=15 // pred_check
          %p249 = pneg %p90
        $region22: #{tpu_custom_call.1} parent=15 // pred_check_branch
          %251 = sbr.rel (%p249) target = $region24
        $region23: #{tpu_custom_call.1} parent=15 // pred_region
          %p252 = scmp.lt.s32.totalorder %s28, 1
          %s253 = scalar_select %p252, %s28, 1
          %s254 = smul.addr %s253, 32
          %s255 = smul.addr %s254, 4
          %s256 = scalar_lea.vmem %s1, %s255
        $region24: #{tpu_custom_call.1} parent=15 // pred_fallthru
          _
        // Predicated region
        $region25: #{tpu_custom_call.1} parent=15 // pred_check
          %p257 = pneg %p116
        $region26: #{tpu_custom_call.1} parent=15 // pred_check_branch
          %259 = sbr.rel (%p257) target = $region28
        $region27: #{tpu_custom_call.1} parent=15 // pred_region
          %p260 = scmp.lt.s32.totalorder %s28, 1
          %s261 = scalar_select %p260, %s28, 1
          %s262 = smul.addr %s261, 8
          %s263 = smul.addr %s262, 4
          %s264 = scalar_lea.vmem %s2, %s263
        $region28: #{tpu_custom_call.1} parent=15 // pred_fallthru
          _
        // Predicated region
        $region29: #{tpu_custom_call.1} parent=15 // pred_check
          %p265 = pneg %p142
        $region30: #{tpu_custom_call.1} parent=15 // pred_check_branch
          %267 = sbr.rel (%p265) target = $region32
        $region31: #{tpu_custom_call.1} parent=15 // pred_region
          %p268 = scmp.lt.s32.totalorder %s28, 1
          %s269 = scalar_select %p268, %s28, 1
          %s270 = scalar_lea.vmem %s3, %s269
        $region32: #{tpu_custom_call.1} parent=15 // pred_fallthru
          _
      $region16: #{tpu_custom_call.1} parent=5 // pred_fallthru
        _
      %p271 = scmp.le.s32.totalorder 1, %s21
      %p272 = scmp.lt.s32.totalorder %s21, 3
      %p273 = pnand %p271, %p272
      %p274 = pneg %p273
      // Predicated region
      $region33: #{tpu_custom_call.1} parent=5 // pred_check
        _
      $region34: #{tpu_custom_call.1} parent=5 // pred_check_branch
        %276 = sbr.rel (%p273) target = $region36
      $region35: #{tpu_custom_call.1} parent=5 // pred_region
        %s277 = ssub.s32 %s21, 1
        %s278 = sand.u32 %s57, 1
        %s279 = scalar_lea.sflag [#allocation4], %s278
        %s280 = sand.u32 %s57, 1
        %s281 = smul.addr %s280, 256
        %s282 = scalar_lea.vmem [#allocation3], %s281
        // Predicated region
        $region37: #{tpu_custom_call.1} parent=35 // pred_check
          %p283 = pneg %p70
        $region38: #{tpu_custom_call.1} parent=35 // pred_check_branch
          %285 = sbr.rel (%p283) target = $region40
        $region39: #{tpu_custom_call.1} parent=35 // pred_region
          %286 = dma.done %s279, 4096
        $region40: #{tpu_custom_call.1} parent=35 // pred_fallthru
          _
        %s287 = sand.u32 %s57, 1
        %s288 = scalar_lea.sflag [#allocation4], %s287
        %s289 = sand.u32 %s57, 1
        %s290 = smul.addr %s289, 256
        %s291 = scalar_lea.vmem [#allocation3], %s290
        %p292 = pneg %p70
        %p293 = pneg %p67
        %p294 = scmp.lt.s32.totalorder %s31, 1
        %s295 = scalar_select %p294, %s31, 1
        %s296 = smul.addr %s295, 32
        %s297 = smul.addr %s296, 4
        %s298 = scalar_lea.vmem %s1, %s297
        %p299 = pneg %p96
        %p300 = pneg %p93
        %p301 = scmp.lt.s32.totalorder %s31, 1
        %s302 = scalar_select %p301, %s31, 1
        %s303 = smul.addr %s302, 8
        %s304 = smul.addr %s303, 4
        %s305 = scalar_lea.vmem %s2, %s304
        %p306 = pneg %p122
        %p307 = pneg %p119
        %p308 = scmp.lt.s32.totalorder %s31, 1
        %s309 = scalar_select %p308, %s31, 1
        %s310 = scalar_lea.vmem %s3, %s309
        %p311 = pneg %p148
        %p312 = pneg %p145
        %p313 = pneg %p176
        %p314 = pneg %p173
        %s315 = sand.u32 %s163, 1
        %s316 = scalar_lea.sflag [#allocation5], %s315
        %s317 = sand.u32 %s163, 1
        %s318 = smul.addr %s317, 256
        %s319 = scalar_lea.vmem [#allocation6], %s318
        %p320 = pneg %p204
        %p321 = pneg %p201
        %s322 = sand.u32 %s191, 1
        %s323 = scalar_lea.sflag [#allocation8], %s322
        %s324 = sand.u32 %s191, 1
        %s325 = smul.addr %s324, 128
        %s326 = scalar_lea.vmem [#allocation7], %s325
        %s327 = smul.u32 32, %s32
        %s328 = smul.u32 2, %s33
        %p329 = scmp.lt.s32.totalorder %s31, 1
        %s330 = scalar_select %p329, %s31, 1
        %s331 = smul.addr %s330, 32
        %s332 = smul.addr %s331, 4
        %s333 = scalar_lea.vmem %s1, %s332
        %p334 = scmp.lt.s32.totalorder %s31, 1
        %s335 = scalar_select %p334, %s31, 1
        %s336 = smul.addr %s335, 8
        %s337 = smul.addr %s336, 4
        %s338 = scalar_lea.vmem %s2, %s337
        %p339 = scmp.lt.s32.totalorder %s31, 1
        %s340 = scalar_select %p339, %s31, 1
        %s341 = scalar_lea.vmem %s3, %s340
        %s342 = smul.u32 32, %s32
        %s343 = smul.u32 32, %s32
        %p345 = scmp.eq.s32.totalorder %s33, 0
        // Predicated region
        $region41: #{tpu_custom_call.1} parent=35 // pred_check
          %p346 = pneg %p345
        $region42: #{tpu_custom_call.1} parent=35 // pred_check_branch
          %348 = sbr.rel (%p346) target = $region44
        $region43: #{tpu_custom_call.1} parent=35 // pred_region
          %vm349 = vcmask 523264
          %350 = vst.msk [vmem:[#allocation2] sm:$0xff] %vm349, 0.0
          %351 = vst.msk [vmem:[#allocation2 + $0x8] sm:$0xff] %vm349, 0.0
          %352 = vst.msk [vmem:[#allocation2 + $0x10] sm:$0xff] %vm349, 0.0
          %353 = vst.msk [vmem:[#allocation2 + $0x18] sm:$0xff] %vm349, 0.0
          %354 = vst.msk [vmem:[#allocation2 + $0x20] sm:$0xff] %vm349, 0.0
          %355 = vst.msk [vmem:[#allocation2 + $0x28] sm:$0xff] %vm349, 0.0
          %356 = vst.msk [vmem:[#allocation2 + $0x30] sm:$0xff] %vm349, 0.0
          %357 = vst.msk [vmem:[#allocation2 + $0x38] sm:$0xff] %vm349, 0.0
          %358 = vst.msk [vmem:[#allocation2 + $0x40] sm:$0xff] %vm349, 0.0
          %359 = vst.msk [vmem:[#allocation2 + $0x48] sm:$0xff] %vm349, 0.0
          %360 = vst.msk [vmem:[#allocation2 + $0x50] sm:$0xff] %vm349, 0.0
          %361 = vst.msk [vmem:[#allocation2 + $0x58] sm:$0xff] %vm349, 0.0
          %362 = vst.msk [vmem:[#allocation2 + $0x60] sm:$0xff] %vm349, 0.0
          %363 = vst.msk [vmem:[#allocation2 + $0x68] sm:$0xff] %vm349, 0.0
          %364 = vst.msk [vmem:[#allocation2 + $0x70] sm:$0xff] %vm349, 0.0
          %365 = vst.msk [vmem:[#allocation2 + $0x78] sm:$0xff] %vm349, 0.0
          %366 = vst.msk [vmem:[#allocation2 + $0x80] sm:$0xff] %vm349, 0.0
          %367 = vst.msk [vmem:[#allocation2 + $0x88] sm:$0xff] %vm349, 0.0
          %368 = vst.msk [vmem:[#allocation2 + $0x90] sm:$0xff] %vm349, 0.0
          %369 = vst.msk [vmem:[#allocation2 + $0x98] sm:$0xff] %vm349, 0.0
          %370 = vst.msk [vmem:[#allocation2 + $0xa0] sm:$0xff] %vm349, 0.0
          %371 = vst.msk [vmem:[#allocation2 + $0xa8] sm:$0xff] %vm349, 0.0
          %372 = vst.msk [vmem:[#allocation2 + $0xb0] sm:$0xff] %vm349, 0.0
          %373 = vst.msk [vmem:[#allocation2 + $0xb8] sm:$0xff] %vm349, 0.0
          %374 = vst.msk [vmem:[#allocation2 + $0xc0] sm:$0xff] %vm349, 0.0
          %375 = vst.msk [vmem:[#allocation2 + $0xc8] sm:$0xff] %vm349, 0.0
          %376 = vst.msk [vmem:[#allocation2 + $0xd0] sm:$0xff] %vm349, 0.0
          %377 = vst.msk [vmem:[#allocation2 + $0xd8] sm:$0xff] %vm349, 0.0
          %378 = vst.msk [vmem:[#allocation2 + $0xe0] sm:$0xff] %vm349, 0.0
          %379 = vst.msk [vmem:[#allocation2 + $0xe8] sm:$0xff] %vm349, 0.0
          %380 = vst.msk [vmem:[#allocation2 + $0xf0] sm:$0xff] %vm349, 0.0
          %381 = vst.msk [vmem:[#allocation2 + $0xf8] sm:$0xff] %vm349, 0.0
        $region44: #{tpu_custom_call.1} parent=35 // pred_fallthru
          _
        %s382 = smul.u32 %s33, 256
        %v383 = vld [vmem:[#allocation2] sm:$0xff]
        %v384 = vld [vmem:[#allocation2 + $0x8] sm:$0xff]
        %v385 = vld [vmem:[#allocation2 + $0x10] sm:$0xff]
        %v386 = vld [vmem:[#allocation2 + $0x18] sm:$0xff]
        %v387 = vld [vmem:[#allocation2 + $0x20] sm:$0xff]
        %v388 = vld [vmem:[#allocation2 + $0x28] sm:$0xff]
        %v389 = vld [vmem:[#allocation2 + $0x30] sm:$0xff]
        %v390 = vld [vmem:[#allocation2 + $0x38] sm:$0xff]
        %v391 = vld [vmem:[#allocation2 + $0x40] sm:$0xff]
        %v392 = vld [vmem:[#allocation2 + $0x48] sm:$0xff]
        %v393 = vld [vmem:[#allocation2 + $0x50] sm:$0xff]
        %v394 = vld [vmem:[#allocation2 + $0x58] sm:$0xff]
        %v395 = vld [vmem:[#allocation2 + $0x60] sm:$0xff]
        %v396 = vld [vmem:[#allocation2 + $0x68] sm:$0xff]
        %v397 = vld [vmem:[#allocation2 + $0x70] sm:$0xff]
        %v398 = vld [vmem:[#allocation2 + $0x78] sm:$0xff]
        %v399 = vld [vmem:[#allocation2 + $0x80] sm:$0xff]
        %v400 = vld [vmem:[#allocation2 + $0x88] sm:$0xff]
        %v401 = vld [vmem:[#allocation2 + $0x90] sm:$0xff]
        %v402 = vld [vmem:[#allocation2 + $0x98] sm:$0xff]
        %v403 = vld [vmem:[#allocation2 + $0xa0] sm:$0xff]
        %v404 = vld [vmem:[#allocation2 + $0xa8] sm:$0xff]
        %v405 = vld [vmem:[#allocation2 + $0xb0] sm:$0xff]
        %v406 = vld [vmem:[#allocation2 + $0xb8] sm:$0xff]
        %v407 = vld [vmem:[#allocation2 + $0xc0] sm:$0xff]
        %v408 = vld [vmem:[#allocation2 + $0xc8] sm:$0xff]
        %v409 = vld [vmem:[#allocation2 + $0xd0] sm:$0xff]
        %v410 = vld [vmem:[#allocation2 + $0xd8] sm:$0xff]
        %v411 = vld [vmem:[#allocation2 + $0xe0] sm:$0xff]
        %v412 = vld [vmem:[#allocation2 + $0xe8] sm:$0xff]
        %v413 = vld [vmem:[#allocation2 + $0xf0] sm:$0xff]
        %v414 = vld [vmem:[#allocation2 + $0xf8] sm:$0xff]
        %v415 = vld [vmem:[%s282] sm:$0xff]
        %v416 = vld [vmem:[%s282 + $0x8] sm:$0xff]
        %v417 = vld [vmem:[%s282 + $0x10] sm:$0xff]
        %v418 = vld [vmem:[%s282 + $0x18] sm:$0xff]
        %v419 = vld [vmem:[%s282 + $0x20] sm:$0xff]
        %v420 = vld [vmem:[%s282 + $0x28] sm:$0xff]
        %v421 = vld [vmem:[%s282 + $0x30] sm:$0xff]
        %v422 = vld [vmem:[%s282 + $0x38] sm:$0xff]
        %v423 = vld [vmem:[%s282 + $0x40] sm:$0xff]
        %v424 = vld [vmem:[%s282 + $0x48] sm:$0xff]
        %v425 = vld [vmem:[%s282 + $0x50] sm:$0xff]
        %v426 = vld [vmem:[%s282 + $0x58] sm:$0xff]
        %v427 = vld [vmem:[%s282 + $0x60] sm:$0xff]
        %v428 = vld [vmem:[%s282 + $0x68] sm:$0xff]
        %v429 = vld [vmem:[%s282 + $0x70] sm:$0xff]
        %v430 = vld [vmem:[%s282 + $0x78] sm:$0xff]
        %v431 = vld [vmem:[%s282 + $0x80] sm:$0xff]
        %v432 = vld [vmem:[%s282 + $0x88] sm:$0xff]
        %v433 = vld [vmem:[%s282 + $0x90] sm:$0xff]
        %v434 = vld [vmem:[%s282 + $0x98] sm:$0xff]
        %v435 = vld [vmem:[%s282 + $0xa0] sm:$0xff]
        %v436 = vld [vmem:[%s282 + $0xa8] sm:$0xff]
        %v437 = vld [vmem:[%s282 + $0xb0] sm:$0xff]
        %v438 = vld [vmem:[%s282 + $0xb8] sm:$0xff]
        %v439 = vld [vmem:[%s282 + $0xc0] sm:$0xff]
        %v440 = vld [vmem:[%s282 + $0xc8] sm:$0xff]
        %v441 = vld [vmem:[%s282 + $0xd0] sm:$0xff]
        %v442 = vld [vmem:[%s282 + $0xd8] sm:$0xff]
        %v443 = vld [vmem:[%s282 + $0xe0] sm:$0xff]
        %v444 = vld [vmem:[%s282 + $0xe8] sm:$0xff]
        %v445 = vld [vmem:[%s282 + $0xf0] sm:$0xff]
        %v446 = vld [vmem:[%s282 + $0xf8] sm:$0xff]
        %s447 = sshra.s32 %s382, 3
        %s448 = sand.u32 %s382, 7
        %s449 = smul.addr %s447, 4
        %s450 = scalar_lea.vmem %s333, %s449
        %v451 = vld [vmem:[%s450] sm:$0xf]
        %v452 = vld [vmem:[%s450 + $0x4] sm:$0xf]
        %v453 = vld [vmem:[%s450 + $0x8] sm:$0xf]
        %v454 = vld [vmem:[%s450 + $0xc] sm:$0xf]
        %v455 = vld [vmem:[%s450 + $0x10] sm:$0xf]
        %v456 = vld [vmem:[%s450 + $0x14] sm:$0xf]
        %v457 = vld [vmem:[%s450 + $0x18] sm:$0xf]
        %v458 = vld [vmem:[%s450 + $0x1c] sm:$0xf]
        %v459 = vld [vmem:[%s450 + $0x20] sm:$0xf]
        %v460 = vld [vmem:[%s450 + $0x24] sm:$0xf]
        %v461 = vld [vmem:[%s450 + $0x28] sm:$0xf]
        %v462 = vld [vmem:[%s450 + $0x2c] sm:$0xf]
        %v463 = vld [vmem:[%s450 + $0x30] sm:$0xf]
        %v464 = vld [vmem:[%s450 + $0x34] sm:$0xf]
        %v465 = vld [vmem:[%s450 + $0x38] sm:$0xf]
        %v466 = vld [vmem:[%s450 + $0x3c] sm:$0xf]
        %v467 = vld [vmem:[%s450 + $0x40] sm:$0xf]
        %v468 = vld [vmem:[%s450 + $0x44] sm:$0xf]
        %v469 = vld [vmem:[%s450 + $0x48] sm:$0xf]
        %v470 = vld [vmem:[%s450 + $0x4c] sm:$0xf]
        %v471 = vld [vmem:[%s450 + $0x50] sm:$0xf]
        %v472 = vld [vmem:[%s450 + $0x54] sm:$0xf]
        %v473 = vld [vmem:[%s450 + $0x58] sm:$0xf]
        %v474 = vld [vmem:[%s450 + $0x5c] sm:$0xf]
        %v475 = vld [vmem:[%s450 + $0x60] sm:$0xf]
        %v476 = vld [vmem:[%s450 + $0x64] sm:$0xf]
        %v477 = vld [vmem:[%s450 + $0x68] sm:$0xf]
        %v478 = vld [vmem:[%s450 + $0x6c] sm:$0xf]
        %v479 = vld [vmem:[%s450 + $0x70] sm:$0xf]
        %v480 = vld [vmem:[%s450 + $0x74] sm:$0xf]
        %v481 = vld [vmem:[%s450 + $0x78] sm:$0xf]
        %v482 = vld [vmem:[%s450 + $0x7c] sm:$0xf]
        %v515 = vunpack.c.l.b16 %v415
        %v516 = vunpack.c.h.b16 %v415
        %v517 = vunpack.c.l.b16 %v416
        %v518 = vunpack.c.h.b16 %v416
        %v519 = vunpack.c.l.b16 %v417
        %v520 = vunpack.c.h.b16 %v417
        %v521 = vunpack.c.l.b16 %v418
        %v522 = vunpack.c.h.b16 %v418
        %v523 = vunpack.c.l.b16 %v419
        %v524 = vunpack.c.h.b16 %v419
        %v525 = vunpack.c.l.b16 %v420
        %v526 = vunpack.c.h.b16 %v420
        %v527 = vunpack.c.l.b16 %v421
        %v528 = vunpack.c.h.b16 %v421
        %v529 = vunpack.c.l.b16 %v422
        %v530 = vunpack.c.h.b16 %v422
        %v531 = vunpack.c.l.b16 %v423
        %v532 = vunpack.c.h.b16 %v423
        %v533 = vunpack.c.l.b16 %v424
        %v534 = vunpack.c.h.b16 %v424
        %v535 = vunpack.c.l.b16 %v425
        %v536 = vunpack.c.h.b16 %v425
        %v537 = vunpack.c.l.b16 %v426
        %v538 = vunpack.c.h.b16 %v426
        %v539 = vunpack.c.l.b16 %v427
        %v540 = vunpack.c.h.b16 %v427
        %v541 = vunpack.c.l.b16 %v428
        %v542 = vunpack.c.h.b16 %v428
        %v543 = vunpack.c.l.b16 %v429
        %v544 = vunpack.c.h.b16 %v429
        %v545 = vunpack.c.l.b16 %v430
        %v546 = vunpack.c.h.b16 %v430
        %v547 = vunpack.c.l.b16 %v431
        %v548 = vunpack.c.h.b16 %v431
        %v549 = vunpack.c.l.b16 %v432
        %v550 = vunpack.c.h.b16 %v432
        %v551 = vunpack.c.l.b16 %v433
        %v552 = vunpack.c.h.b16 %v433
        %v553 = vunpack.c.l.b16 %v434
        %v554 = vunpack.c.h.b16 %v434
        %v555 = vunpack.c.l.b16 %v435
        %v556 = vunpack.c.h.b16 %v435
        %v557 = vunpack.c.l.b16 %v436
        %v558 = vunpack.c.h.b16 %v436
        %v559 = vunpack.c.l.b16 %v437
        %v560 = vunpack.c.h.b16 %v437
        %v561 = vunpack.c.l.b16 %v438
        %v562 = vunpack.c.h.b16 %v438
        %v563 = vunpack.c.l.b16 %v439
        %v564 = vunpack.c.h.b16 %v439
        %v565 = vunpack.c.l.b16 %v440
        %v566 = vunpack.c.h.b16 %v440
        %v567 = vunpack.c.l.b16 %v441
        %v568 = vunpack.c.h.b16 %v441
        %v569 = vunpack.c.l.b16 %v442
        %v570 = vunpack.c.h.b16 %v442
        %v571 = vunpack.c.l.b16 %v443
        %v572 = vunpack.c.h.b16 %v443
        %v573 = vunpack.c.l.b16 %v444
        %v574 = vunpack.c.h.b16 %v444
        %v575 = vunpack.c.l.b16 %v445
        %v576 = vunpack.c.h.b16 %v445
        %v577 = vunpack.c.l.b16 %v446
        %v578 = vunpack.c.h.b16 %v446
        %v579 = vpack.c.b16 %v517, %v515
        %v580 = vpack.c.b16 %v518, %v516
        %v581 = vpack.c.b16 %v521, %v519
        %v582 = vpack.c.b16 %v522, %v520
        %v583 = vpack.c.b16 %v525, %v523
        %v584 = vpack.c.b16 %v526, %v524
        %v585 = vpack.c.b16 %v529, %v527
        %v586 = vpack.c.b16 %v530, %v528
        %v587 = vpack.c.b16 %v533, %v531
        %v588 = vpack.c.b16 %v534, %v532
        %v589 = vpack.c.b16 %v537, %v535
        %v590 = vpack.c.b16 %v538, %v536
        %v591 = vpack.c.b16 %v541, %v539
        %v592 = vpack.c.b16 %v542, %v540
        %v593 = vpack.c.b16 %v545, %v543
        %v594 = vpack.c.b16 %v546, %v544
        %v595 = vpack.c.b16 %v549, %v547
        %v596 = vpack.c.b16 %v550, %v548
        %v597 = vpack.c.b16 %v553, %v551
        %v598 = vpack.c.b16 %v554, %v552
        %v599 = vpack.c.b16 %v557, %v555
        %v600 = vpack.c.b16 %v558, %v556
        %v601 = vpack.c.b16 %v561, %v559
        %v602 = vpack.c.b16 %v562, %v560
        %v603 = vpack.c.b16 %v565, %v563
        %v604 = vpack.c.b16 %v566, %v564
        %v605 = vpack.c.b16 %v569, %v567
        %v606 = vpack.c.b16 %v570, %v568
        %v607 = vpack.c.b16 %v573, %v571
        %v608 = vpack.c.b16 %v574, %v572
        %v609 = vpack.c.b16 %v577, %v575
        %v610 = vpack.c.b16 %v578, %v576
        %v675 = vunpack.c.l.b16 %v451
        %v676 = vunpack.c.l.b16 %v452
        %v677 = vunpack.c.l.b16 %v453
        %v678 = vunpack.c.l.b16 %v454
        %v679 = vunpack.c.l.b16 %v455
        %v680 = vunpack.c.l.b16 %v456
        %v681 = vunpack.c.l.b16 %v457
        %v682 = vunpack.c.l.b16 %v458
        %v683 = vunpack.c.l.b16 %v459
        %v684 = vunpack.c.l.b16 %v460
        %v685 = vunpack.c.l.b16 %v461
        %v686 = vunpack.c.l.b16 %v462
        %v687 = vunpack.c.l.b16 %v463
        %v688 = vunpack.c.l.b16 %v464
        %v689 = vunpack.c.l.b16 %v465
        %v690 = vunpack.c.l.b16 %v466
        %v691 = vunpack.c.l.b16 %v467
        %v692 = vunpack.c.l.b16 %v468
        %v693 = vunpack.c.l.b16 %v469
        %v694 = vunpack.c.l.b16 %v470
        %v695 = vunpack.c.l.b16 %v471
        %v696 = vunpack.c.l.b16 %v472
        %v697 = vunpack.c.l.b16 %v473
        %v698 = vunpack.c.l.b16 %v474
        %v699 = vunpack.c.l.b16 %v475
        %v700 = vunpack.c.l.b16 %v476
        %v701 = vunpack.c.l.b16 %v477
        %v702 = vunpack.c.l.b16 %v478
        %v703 = vunpack.c.l.b16 %v479
        %v704 = vunpack.c.l.b16 %v480
        %v705 = vunpack.c.l.b16 %v481
        %v706 = vunpack.c.l.b16 %v482
        %v707 = vpack.c.b16 %v676, %v675
        %v708 = vpack.c.b16 %v678, %v677
        %v709 = vpack.c.b16 %v680, %v679
        %v710 = vpack.c.b16 %v682, %v681
        %v711 = vpack.c.b16 %v684, %v683
        %v712 = vpack.c.b16 %v686, %v685
        %v713 = vpack.c.b16 %v688, %v687
        %v714 = vpack.c.b16 %v690, %v689
        %v715 = vpack.c.b16 %v692, %v691
        %v716 = vpack.c.b16 %v694, %v693
        %v717 = vpack.c.b16 %v696, %v695
        %v718 = vpack.c.b16 %v698, %v697
        %v719 = vpack.c.b16 %v700, %v699
        %v720 = vpack.c.b16 %v702, %v701
        %v721 = vpack.c.b16 %v704, %v703
        %v722 = vpack.c.b16 %v706, %v705
        %739 = vmatprep.subr.bf16.mxu0 0
        %740 = vmatpush1.bf16.msra.mxu0 %v707
        %741 = vmatprep.subr.bf16.mxu0 0
        %742 = vmatpush1.bf16.msra.mxu0 %v708
        %743 = vmatprep.subr.bf16.mxu0 0
        %744 = vmatpush1.bf16.msra.mxu0 %v709
        %745 = vmatprep.subr.bf16.mxu0 0
        %746 = vmatpush1.bf16.msra.mxu0 %v710
        %747 = vmatprep.subr.bf16.mxu0 0
        %748 = vmatpush1.bf16.msra.mxu0 %v711
        %749 = vmatprep.subr.bf16.mxu0 0
        %750 = vmatpush1.bf16.msra.mxu0 %v712
        %751 = vmatprep.subr.bf16.mxu0 0
        %752 = vmatpush1.bf16.msra.mxu0 %v713
        %753 = vmatprep.subr.bf16.mxu0 0
        %754 = vmatpush1.bf16.msra.mxu0 %v714
        %755 = vmatprep.subr.bf16.mxu0 0
        %756 = vmatpush1.bf16.msra.mxu0 %v715
        %757 = vmatprep.subr.bf16.mxu0 0
        %758 = vmatpush1.bf16.msra.mxu0 %v716
        %759 = vmatprep.subr.bf16.mxu0 0
        %760 = vmatpush1.bf16.msra.mxu0 %v717
        %761 = vmatprep.subr.bf16.mxu0 0
        %762 = vmatpush1.bf16.msra.mxu0 %v718
        %763 = vmatprep.subr.bf16.mxu0 0
        %764 = vmatpush1.bf16.msra.mxu0 %v719
        %765 = vmatprep.subr.bf16.mxu0 0
        %766 = vmatpush1.bf16.msra.mxu0 %v720
        %767 = vmatprep.subr.bf16.mxu0 0
        %768 = vmatpush1.bf16.msra.mxu0 %v721
        %769 = vmatprep.subr.bf16.mxu0 0
        %770 = vmatpush1.bf16.msra.mxu0 %v722
        %771 = vmatprep.mubr.bf16.mxu0 %v580
        %772 = vmatmul.mubr.bf16.gmra.mrb[0].mxu0 %v579
        %v773 = vpop.f32.mrb[0].mxu0
        %v774 = vadd.f32 0.0, %v773
        %v775 = vpop.f32.mrb[0].mxu0
        %v776 = vpop.f32.mrb[0].mxu0
        %v777 = vadd.f32 0.0, %v776
        %v778 = vpop.f32.mrb[0].mxu0
        %779 = vmatprep.mubr.bf16.mxu0 %v582
        %780 = vmatmul.mubr.bf16.gmra.mrb[0].mxu0 %v581
        %v781 = vpop.f32.mrb[0].mxu0
        %v782 = vadd.f32 0.0, %v781
        %v783 = vpop.f32.mrb[0].mxu0
        %v784 = vpop.f32.mrb[0].mxu0
        %v785 = vadd.f32 0.0, %v784
        %v786 = vpop.f32.mrb[0].mxu0
        %787 = vmatprep.mubr.bf16.mxu0 %v584
        %788 = vmatmul.mubr.bf16.gmra.mrb[0].mxu0 %v583
        %v789 = vpop.f32.mrb[0].mxu0
        %v790 = vadd.f32 0.0, %v789
        %v791 = vpop.f32.mrb[0].mxu0
        %v792 = vpop.f32.mrb[0].mxu0
        %v793 = vadd.f32 0.0, %v792
        %v794 = vpop.f32.mrb[0].mxu0
        %795 = vmatprep.mubr.bf16.mxu0 %v586
        %796 = vmatmul.mubr.bf16.gmra.mrb[0].mxu0 %v585
        %v797 = vpop.f32.mrb[0].mxu0
        %v798 = vadd.f32 0.0, %v797
        %v799 = vpop.f32.mrb[0].mxu0
        %v800 = vpop.f32.mrb[0].mxu0
        %v801 = vadd.f32 0.0, %v800
        %v802 = vpop.f32.mrb[0].mxu0
        %803 = vmatprep.mubr.bf16.mxu0 %v588
        %804 = vmatmul.mubr.bf16.gmra.mrb[0].mxu0 %v587
        %v805 = vpop.f32.mrb[0].mxu0
        %v806 = vadd.f32 0.0, %v805
        %v807 = vpop.f32.mrb[0].mxu0
        %v808 = vpop.f32.mrb[0].mxu0
        %v809 = vadd.f32 0.0, %v808
        %v810 = vpop.f32.mrb[0].mxu0
        %811 = vmatprep.mubr.bf16.mxu0 %v590
        %812 = vmatmul.mubr.bf16.gmra.mrb[0].mxu0 %v589
        %v813 = vpop.f32.mrb[0].mxu0
        %v814 = vadd.f32 0.0, %v813
        %v815 = vpop.f32.mrb[0].mxu0
        %v816 = vpop.f32.mrb[0].mxu0
        %v817 = vadd.f32 0.0, %v816
        %v818 = vpop.f32.mrb[0].mxu0
        %819 = vmatprep.mubr.bf16.mxu0 %v592
        %820 = vmatmul.mubr.bf16.gmra.mrb[0].mxu0 %v591
        %v821 = vpop.f32.mrb[0].mxu0
        %v822 = vadd.f32 0.0, %v821
        %v823 = vpop.f32.mrb[0].mxu0
        %v824 = vpop.f32.mrb[0].mxu0
        %v825 = vadd.f32 0.0, %v824
        %v826 = vpop.f32.mrb[0].mxu0
        %827 = vmatprep.mubr.bf16.mxu0 %v594
        %828 = vmatmul.mubr.bf16.gmra.mrb[0].mxu0 %v593
        %v829 = vpop.f32.mrb[0].mxu0
        %v830 = vadd.f32 0.0, %v829
        %v831 = vpop.f32.mrb[0].mxu0
        %v832 = vpop.f32.mrb[0].mxu0
        %v833 = vadd.f32 0.0, %v832
        %v834 = vpop.f32.mrb[0].mxu0
        %835 = vmatprep.mubr.bf16.mxu0 %v596
        %836 = vmatmul.mubr.bf16.gmra.mrb[0].mxu0 %v595
        %v837 = vpop.f32.mrb[0].mxu0
        %v838 = vadd.f32 0.0, %v837
        %v839 = vpop.f32.mrb[0].mxu0
        %v840 = vpop.f32.mrb[0].mxu0
        %v841 = vadd.f32 0.0, %v840
        %v842 = vpop.f32.mrb[0].mxu0
        %843 = vmatprep.mubr.bf16.mxu0 %v598
        %844 = vmatmul.mubr.bf16.gmra.mrb[0].mxu0 %v597
        %v845 = vpop.f32.mrb[0].mxu0
        %v846 = vadd.f32 0.0, %v845
        %v847 = vpop.f32.mrb[0].mxu0
        %v848 = vpop.f32.mrb[0].mxu0
        %v849 = vadd.f32 0.0, %v848
        %v850 = vpop.f32.mrb[0].mxu0
        %851 = vmatprep.mubr.bf16.mxu0 %v600
        %852 = vmatmul.mubr.bf16.gmra.mrb[0].mxu0 %v599
        %v853 = vpop.f32.mrb[0].mxu0
        %v854 = vadd.f32 0.0, %v853
        %v855 = vpop.f32.mrb[0].mxu0
        %v856 = vpop.f32.mrb[0].mxu0
        %v857 = vadd.f32 0.0, %v856
        %v858 = vpop.f32.mrb[0].mxu0
        %859 = vmatprep.mubr.bf16.mxu0 %v602
        %860 = vmatmul.mubr.bf16.gmra.mrb[0].mxu0 %v601
        %v861 = vpop.f32.mrb[0].mxu0
        %v862 = vadd.f32 0.0, %v861
        %v863 = vpop.f32.mrb[0].mxu0
        %v864 = vpop.f32.mrb[0].mxu0
        %v865 = vadd.f32 0.0, %v864
        %v866 = vpop.f32.mrb[0].mxu0
        %867 = vmatprep.mubr.bf16.mxu0 %v604
        %868 = vmatmul.mubr.bf16.gmra.mrb[0].mxu0 %v603
        %v869 = vpop.f32.mrb[0].mxu0
        %v870 = vadd.f32 0.0, %v869
        %v871 = vpop.f32.mrb[0].mxu0
        %v872 = vpop.f32.mrb[0].mxu0
        %v873 = vadd.f32 0.0, %v872
        %v874 = vpop.f32.mrb[0].mxu0
        %875 = vmatprep.mubr.bf16.mxu0 %v606
        %876 = vmatmul.mubr.bf16.gmra.mrb[0].mxu0 %v605
        %v877 = vpop.f32.mrb[0].mxu0
        %v878 = vadd.f32 0.0, %v877
        %v879 = vpop.f32.mrb[0].mxu0
        %v880 = vpop.f32.mrb[0].mxu0
        %v881 = vadd.f32 0.0, %v880
        %v882 = vpop.f32.mrb[0].mxu0
        %883 = vmatprep.mubr.bf16.mxu0 %v608
        %884 = vmatmul.mubr.bf16.gmra.mrb[0].mxu0 %v607
        %v885 = vpop.f32.mrb[0].mxu0
        %v886 = vadd.f32 0.0, %v885
        %v887 = vpop.f32.mrb[0].mxu0
        %v888 = vpop.f32.mrb[0].mxu0
        %v889 = vadd.f32 0.0, %v888
        %v890 = vpop.f32.mrb[0].mxu0
        %891 = vmatprep.mubr.bf16.mxu0 %v610
        %892 = vmatmul.mubr.bf16.gmra.mrb[0].mxu0 %v609
        %v893 = vpop.f32.mrb[0].mxu0
        %v894 = vadd.f32 0.0, %v893
        %v895 = vpop.f32.mrb[0].mxu0
        %v896 = vpop.f32.mrb[0].mxu0
        %v897 = vadd.f32 0.0, %v896
        %v898 = vpop.f32.mrb[0].mxu0
        %899 = vdwg.mxu0
        %v900 = vadd.f32 %v383, %v774
        %v901 = vadd.f32 %v384, %v777
        %v902 = vadd.f32 %v385, %v782
        %v903 = vadd.f32 %v386, %v785
        %v904 = vadd.f32 %v387, %v790
        %v905 = vadd.f32 %v388, %v793
        %v906 = vadd.f32 %v389, %v798
        %v907 = vadd.f32 %v390, %v801
        %v908 = vadd.f32 %v391, %v806
        %v909 = vadd.f32 %v392, %v809
        %v910 = vadd.f32 %v393, %v814
        %v911 = vadd.f32 %v394, %v817
        %v912 = vadd.f32 %v395, %v822
        %v913 = vadd.f32 %v396, %v825
        %v914 = vadd.f32 %v397, %v830
        %v915 = vadd.f32 %v398, %v833
        %v916 = vadd.f32 %v399, %v838
        %v917 = vadd.f32 %v400, %v841
        %v918 = vadd.f32 %v401, %v846
        %v919 = vadd.f32 %v402, %v849
        %v920 = vadd.f32 %v403, %v854
        %v921 = vadd.f32 %v404, %v857
        %v922 = vadd.f32 %v405, %v862
        %v923 = vadd.f32 %v406, %v865
        %v924 = vadd.f32 %v407, %v870
        %v925 = vadd.f32 %v408, %v873
        %v926 = vadd.f32 %v409, %v878
        %v927 = vadd.f32 %v410, %v881
        %v928 = vadd.f32 %v411, %v886
        %v929 = vadd.f32 %v412, %v889
        %v930 = vadd.f32 %v413, %v894
        %v931 = vadd.f32 %v414, %v897
        %vm932 = vcmask 523264
        %933 = vst.msk [vmem:[#allocation2] sm:$0xff] %vm932, %v900
        %934 = vst.msk [vmem:[#allocation2 + $0x8] sm:$0xff] %vm932, %v901
        %935 = vst.msk [vmem:[#allocation2 + $0x10] sm:$0xff] %vm932, %v902
        %936 = vst.msk [vmem:[#allocation2 + $0x18] sm:$0xff] %vm932, %v903
        %937 = vst.msk [vmem:[#allocation2 + $0x20] sm:$0xff] %vm932, %v904
        %938 = vst.msk [vmem:[#allocation2 + $0x28] sm:$0xff] %vm932, %v905
        %939 = vst.msk [vmem:[#allocation2 + $0x30] sm:$0xff] %vm932, %v906
        %940 = vst.msk [vmem:[#allocation2 + $0x38] sm:$0xff] %vm932, %v907
        %941 = vst.msk [vmem:[#allocation2 + $0x40] sm:$0xff] %vm932, %v908
        %942 = vst.msk [vmem:[#allocation2 + $0x48] sm:$0xff] %vm932, %v909
        %943 = vst.msk [vmem:[#allocation2 + $0x50] sm:$0xff] %vm932, %v910
        %944 = vst.msk [vmem:[#allocation2 + $0x58] sm:$0xff] %vm932, %v911
        %945 = vst.msk [vmem:[#allocation2 + $0x60] sm:$0xff] %vm932, %v912
        %946 = vst.msk [vmem:[#allocation2 + $0x68] sm:$0xff] %vm932, %v913
        %947 = vst.msk [vmem:[#allocation2 + $0x70] sm:$0xff] %vm932, %v914
        %948 = vst.msk [vmem:[#allocation2 + $0x78] sm:$0xff] %vm932, %v915
        %949 = vst.msk [vmem:[#allocation2 + $0x80] sm:$0xff] %vm932, %v916
        %950 = vst.msk [vmem:[#allocation2 + $0x88] sm:$0xff] %vm932, %v917
        %951 = vst.msk [vmem:[#allocation2 + $0x90] sm:$0xff] %vm932, %v918
        %952 = vst.msk [vmem:[#allocation2 + $0x98] sm:$0xff] %vm932, %v919
        %953 = vst.msk [vmem:[#allocation2 + $0xa0] sm:$0xff] %vm932, %v920
        %954 = vst.msk [vmem:[#allocation2 + $0xa8] sm:$0xff] %vm932, %v921
        %955 = vst.msk [vmem:[#allocation2 + $0xb0] sm:$0xff] %vm932, %v922
        %956 = vst.msk [vmem:[#allocation2 + $0xb8] sm:$0xff] %vm932, %v923
        %957 = vst.msk [vmem:[#allocation2 + $0xc0] sm:$0xff] %vm932, %v924
        %958 = vst.msk [vmem:[#allocation2 + $0xc8] sm:$0xff] %vm932, %v925
        %959 = vst.msk [vmem:[#allocation2 + $0xd0] sm:$0xff] %vm932, %v926
        %960 = vst.msk [vmem:[#allocation2 + $0xd8] sm:$0xff] %vm932, %v927
        %961 = vst.msk [vmem:[#allocation2 + $0xe0] sm:$0xff] %vm932, %v928
        %962 = vst.msk [vmem:[#allocation2 + $0xe8] sm:$0xff] %vm932, %v929
        %963 = vst.msk [vmem:[#allocation2 + $0xf0] sm:$0xff] %vm932, %v930
        %964 = vst.msk [vmem:[#allocation2 + $0xf8] sm:$0xff] %vm932, %v931
        // Predicated region
        $region45: #{tpu_custom_call.1} parent=35 // pred_check
          %p965 = pneg %p345
        $region46: #{tpu_custom_call.1} parent=35 // pred_check_branch
          %967 = sbr.rel (%p965) target = $region48
        $region47: #{tpu_custom_call.1} parent=35 // pred_region
          %v968 = vld [vmem:[#allocation2] sm:$0xff]
          %v969 = vld [vmem:[#allocation2 + $0x8] sm:$0xff]
          %v970 = vld [vmem:[#allocation2 + $0x10] sm:$0xff]
          %v971 = vld [vmem:[#allocation2 + $0x18] sm:$0xff]
          %v972 = vld [vmem:[#allocation2 + $0x20] sm:$0xff]
          %v973 = vld [vmem:[#allocation2 + $0x28] sm:$0xff]
          %v974 = vld [vmem:[#allocation2 + $0x30] sm:$0xff]
          %v975 = vld [vmem:[#allocation2 + $0x38] sm:$0xff]
          %v976 = vld [vmem:[#allocation2 + $0x40] sm:$0xff]
          %v977 = vld [vmem:[#allocation2 + $0x48] sm:$0xff]
          %v978 = vld [vmem:[#allocation2 + $0x50] sm:$0xff]
          %v979 = vld [vmem:[#allocation2 + $0x58] sm:$0xff]
          %v980 = vld [vmem:[#allocation2 + $0x60] sm:$0xff]
          %v981 = vld [vmem:[#allocation2 + $0x68] sm:$0xff]
          %v982 = vld [vmem:[#allocation2 + $0x70] sm:$0xff]
          %v983 = vld [vmem:[#allocation2 + $0x78] sm:$0xff]
          %v984 = vld [vmem:[#allocation2 + $0x80] sm:$0xff]
          %v985 = vld [vmem:[#allocation2 + $0x88] sm:$0xff]
          %v986 = vld [vmem:[#allocation2 + $0x90] sm:$0xff]
          %v987 = vld [vmem:[#allocation2 + $0x98] sm:$0xff]
          %v988 = vld [vmem:[#allocation2 + $0xa0] sm:$0xff]
          %v989 = vld [vmem:[#allocation2 + $0xa8] sm:$0xff]
          %v990 = vld [vmem:[#allocation2 + $0xb0] sm:$0xff]
          %v991 = vld [vmem:[#allocation2 + $0xb8] sm:$0xff]
          %v992 = vld [vmem:[#allocation2 + $0xc0] sm:$0xff]
          %v993 = vld [vmem:[#allocation2 + $0xc8] sm:$0xff]
          %v994 = vld [vmem:[#allocation2 + $0xd0] sm:$0xff]
          %v995 = vld [vmem:[#allocation2 + $0xd8] sm:$0xff]
          %v996 = vld [vmem:[#allocation2 + $0xe0] sm:$0xff]
          %v997 = vld [vmem:[#allocation2 + $0xe8] sm:$0xff]
          %v998 = vld [vmem:[#allocation2 + $0xf0] sm:$0xff]
          %v999 = vld [vmem:[#allocation2 + $0xf8] sm:$0xff]
          %v1000 = vpack.c.bf16 %v969, %v968
          %v1001 = vpack.c.bf16 %v971, %v970
          %v1002 = vpack.c.bf16 %v973, %v972
          %v1003 = vpack.c.bf16 %v975, %v974
          %v1004 = vpack.c.bf16 %v977, %v976
          %v1005 = vpack.c.bf16 %v979, %v978
          %v1006 = vpack.c.bf16 %v981, %v980
          %v1007 = vpack.c.bf16 %v983, %v982
          %v1008 = vpack.c.bf16 %v985, %v984
          %v1009 = vpack.c.bf16 %v987, %v986
          %v1010 = vpack.c.bf16 %v989, %v988
          %v1011 = vpack.c.bf16 %v991, %v990
          %v1012 = vpack.c.bf16 %v993, %v992
          %v1013 = vpack.c.bf16 %v995, %v994
          %v1014 = vpack.c.bf16 %v997, %v996
          %v1015 = vpack.c.bf16 %v999, %v998
          %v1016 = vld [vmem:[%s338] sm:$0xf]
          %v1017 = vld [vmem:[%s338 + $0x4] sm:$0xf]
          %v1018 = vld [vmem:[%s338 + $0x8] sm:$0xf]
          %v1019 = vld [vmem:[%s338 + $0xc] sm:$0xf]
          %v1020 = vld [vmem:[%s338 + $0x10] sm:$0xf]
          %v1021 = vld [vmem:[%s338 + $0x14] sm:$0xf]
          %v1022 = vld [vmem:[%s338 + $0x18] sm:$0xf]
          %v1023 = vld [vmem:[%s338 + $0x1c] sm:$0xf]
          %v1024 = vld [vmem:[%s341] sm:$0x1]
          %v1026 = vlaneseq
          %v1027 = vshrl.u32 %v1026, 7
          %v1028 = vsub.s32 0, %v1027
          %v1029 = vrot.slane %v1024, %v1028
          %v1039 = vunpack.c.l.b16 %v1016
          %v1040 = vunpack.c.l.b16 %v1017
          %v1041 = vunpack.c.l.b16 %v1018
          %v1042 = vunpack.c.l.b16 %v1019
          %v1043 = vunpack.c.l.b16 %v1020
          %v1044 = vunpack.c.l.b16 %v1021
          %v1045 = vunpack.c.l.b16 %v1022
          %v1046 = vunpack.c.l.b16 %v1023
          %v1047 = vpack.c.b16 %v1040, %v1039
          %v1048 = vpack.c.b16 %v1042, %v1041
          %v1049 = vpack.c.b16 %v1044, %v1043
          %v1050 = vpack.c.b16 %v1046, %v1045
          %v1056 = vsel %vm932, %v1000, 0
          %v1059 = vsel %vm932, %v1001, 0
          %v1062 = vsel %vm932, %v1002, 0
          %v1065 = vsel %vm932, %v1003, 0
          %v1068 = vsel %vm932, %v1004, 0
          %v1071 = vsel %vm932, %v1005, 0
          %v1074 = vsel %vm932, %v1006, 0
          %v1077 = vsel %vm932, %v1007, 0
          %v1080 = vsel %vm932, %v1008, 0
          %v1083 = vsel %vm932, %v1009, 0
          %v1086 = vsel %vm932, %v1010, 0
          %v1089 = vsel %vm932, %v1011, 0
          %v1092 = vsel %vm932, %v1012, 0
          %v1095 = vsel %vm932, %v1013, 0
          %v1098 = vsel %vm932, %v1014, 0
          %v1101 = vsel %vm932, %v1015, 0
          %1103 = vmatprep.subr.bf16.mxu0 0
          %1104 = vmatpush1.bf16.msra.mxu0 %v1047
          %1105 = vmatprep.subr.bf16.mxu0 0
          %1106 = vmatpush1.bf16.msra.mxu0 %v1048
          %1107 = vmatprep.subr.bf16.mxu0 0
          %1108 = vmatpush1.bf16.msra.mxu0 %v1049
          %1109 = vmatprep.subr.bf16.mxu0 0
          %1110 = vmatpush1.bf16.msra.mxu0 %v1050
          %1111 = vmatprep.subr.bf16.mxu0 0
          %1112 = vmatpush1.bf16.msra.mxu0 0
          %1113 = vmatprep.subr.bf16.mxu0 0
          %1114 = vmatpush1.bf16.msra.mxu0 0
          %1115 = vmatprep.subr.bf16.mxu0 0
          %1116 = vmatpush1.bf16.msra.mxu0 0
          %1117 = vmatprep.subr.bf16.mxu0 0
          %1118 = vmatpush1.bf16.msra.mxu0 0
          %1119 = vmatprep.subr.bf16.mxu0 0
          %1120 = vmatpush1.bf16.msra.mxu0 0
          %1121 = vmatprep.subr.bf16.mxu0 0
          %1122 = vmatpush1.bf16.msra.mxu0 0
          %1123 = vmatprep.subr.bf16.mxu0 0
          %1124 = vmatpush1.bf16.msra.mxu0 0
          %1125 = vmatprep.subr.bf16.mxu0 0
          %1126 = vmatpush1.bf16.msra.mxu0 0
          %1127 = vmatprep.subr.bf16.mxu0 0
          %1128 = vmatpush1.bf16.msra.mxu0 0
          %1129 = vmatprep.subr.bf16.mxu0 0
          %1130 = vmatpush1.bf16.msra.mxu0 0
          %1131 = vmatprep.subr.bf16.mxu0 0
          %1132 = vmatpush1.bf16.msra.mxu0 0
          %1133 = vmatprep.subr.bf16.mxu0 0
          %1134 = vmatpush1.bf16.msra.mxu0 0
          %1135 = vmatprep.mubr.bf16.mxu0 0
          %1136 = vmatmul.mubr.bf16.gmra.mrb[0].mxu0 %v1056
          %v1137 = vpop.f32.mrb[0].mxu0
          %v1138 = vadd.f32 %v1029, %v1137
          %v1139 = vpop.f32.mrb[0].mxu0
          %v1140 = vpop.f32.mrb[0].mxu0
          %v1141 = vadd.f32 %v1029, %v1140
          %v1142 = vpop.f32.mrb[0].mxu0
          %1143 = vmatprep.mubr.bf16.mxu0 0
          %1144 = vmatmul.mubr.bf16.gmra.mrb[0].mxu0 %v1059
          %v1145 = vpop.f32.mrb[0].mxu0
          %v1146 = vadd.f32 %v1029, %v1145
          %v1147 = vpop.f32.mrb[0].mxu0
          %v1148 = vpop.f32.mrb[0].mxu0
          %v1149 = vadd.f32 %v1029, %v1148
          %v1150 = vpop.f32.mrb[0].mxu0
          %1151 = vmatprep.mubr.bf16.mxu0 0
          %1152 = vmatmul.mubr.bf16.gmra.mrb[0].mxu0 %v1062
          %v1153 = vpop.f32.mrb[0].mxu0
          %v1154 = vadd.f32 %v1029, %v1153
          %v1155 = vpop.f32.mrb[0].mxu0
          %v1156 = vpop.f32.mrb[0].mxu0
          %v1157 = vadd.f32 %v1029, %v1156
          %v1158 = vpop.f32.mrb[0].mxu0
          %1159 = vmatprep.mubr.bf16.mxu0 0
          %1160 = vmatmul.mubr.bf16.gmra.mrb[0].mxu0 %v1065
          %v1161 = vpop.f32.mrb[0].mxu0
          %v1162 = vadd.f32 %v1029, %v1161
          %v1163 = vpop.f32.mrb[0].mxu0
          %v1164 = vpop.f32.mrb[0].mxu0
          %v1165 = vadd.f32 %v1029, %v1164
          %v1166 = vpop.f32.mrb[0].mxu0
          %1167 = vmatprep.mubr.bf16.mxu0 0
          %1168 = vmatmul.mubr.bf16.gmra.mrb[0].mxu0 %v1068
          %v1169 = vpop.f32.mrb[0].mxu0
          %v1170 = vadd.f32 %v1029, %v1169
          %v1171 = vpop.f32.mrb[0].mxu0
          %v1172 = vpop.f32.mrb[0].mxu0
          %v1173 = vadd.f32 %v1029, %v1172
          %v1174 = vpop.f32.mrb[0].mxu0
          %1175 = vmatprep.mubr.bf16.mxu0 0
          %1176 = vmatmul.mubr.bf16.gmra.mrb[0].mxu0 %v1071
          %v1177 = vpop.f32.mrb[0].mxu0
          %v1178 = vadd.f32 %v1029, %v1177
          %v1179 = vpop.f32.mrb[0].mxu0
          %v1180 = vpop.f32.mrb[0].mxu0
          %v1181 = vadd.f32 %v1029, %v1180
          %v1182 = vpop.f32.mrb[0].mxu0
          %1183 = vmatprep.mubr.bf16.mxu0 0
          %1184 = vmatmul.mubr.bf16.gmra.mrb[0].mxu0 %v1074
          %v1185 = vpop.f32.mrb[0].mxu0
          %v1186 = vadd.f32 %v1029, %v1185
          %v1187 = vpop.f32.mrb[0].mxu0
          %v1188 = vpop.f32.mrb[0].mxu0
          %v1189 = vadd.f32 %v1029, %v1188
          %v1190 = vpop.f32.mrb[0].mxu0
          %1191 = vmatprep.mubr.bf16.mxu0 0
          %1192 = vmatmul.mubr.bf16.gmra.mrb[0].mxu0 %v1077
          %v1193 = vpop.f32.mrb[0].mxu0
          %v1194 = vadd.f32 %v1029, %v1193
          %v1195 = vpop.f32.mrb[0].mxu0
          %v1196 = vpop.f32.mrb[0].mxu0
          %v1197 = vadd.f32 %v1029, %v1196
          %v1198 = vpop.f32.mrb[0].mxu0
          %1199 = vmatprep.mubr.bf16.mxu0 0
          %1200 = vmatmul.mubr.bf16.gmra.mrb[0].mxu0 %v1080
          %v1201 = vpop.f32.mrb[0].mxu0
          %v1202 = vadd.f32 %v1029, %v1201
          %v1203 = vpop.f32.mrb[0].mxu0
          %v1204 = vpop.f32.mrb[0].mxu0
          %v1205 = vadd.f32 %v1029, %v1204
          %v1206 = vpop.f32.mrb[0].mxu0
          %1207 = vmatprep.mubr.bf16.mxu0 0
          %1208 = vmatmul.mubr.bf16.gmra.mrb[0].mxu0 %v1083
          %v1209 = vpop.f32.mrb[0].mxu0
          %v1210 = vadd.f32 %v1029, %v1209
          %v1211 = vpop.f32.mrb[0].mxu0
          %v1212 = vpop.f32.mrb[0].mxu0
          %v1213 = vadd.f32 %v1029, %v1212
          %v1214 = vpop.f32.mrb[0].mxu0
          %1215 = vmatprep.mubr.bf16.mxu0 0
          %1216 = vmatmul.mubr.bf16.gmra.mrb[0].mxu0 %v1086
          %v1217 = vpop.f32.mrb[0].mxu0
          %v1218 = vadd.f32 %v1029, %v1217
          %v1219 = vpop.f32.mrb[0].mxu0
          %v1220 = vpop.f32.mrb[0].mxu0
          %v1221 = vadd.f32 %v1029, %v1220
          %v1222 = vpop.f32.mrb[0].mxu0
          %1223 = vmatprep.mubr.bf16.mxu0 0
          %1224 = vmatmul.mubr.bf16.gmra.mrb[0].mxu0 %v1089
          %v1225 = vpop.f32.mrb[0].mxu0
          %v1226 = vadd.f32 %v1029, %v1225
          %v1227 = vpop.f32.mrb[0].mxu0
          %v1228 = vpop.f32.mrb[0].mxu0
          %v1229 = vadd.f32 %v1029, %v1228
          %v1230 = vpop.f32.mrb[0].mxu0
          %1231 = vmatprep.mubr.bf16.mxu0 0
          %1232 = vmatmul.mubr.bf16.gmra.mrb[0].mxu0 %v1092
          %v1233 = vpop.f32.mrb[0].mxu0
          %v1234 = vadd.f32 %v1029, %v1233
          %v1235 = vpop.f32.mrb[0].mxu0
          %v1236 = vpop.f32.mrb[0].mxu0
          %v1237 = vadd.f32 %v1029, %v1236
          %v1238 = vpop.f32.mrb[0].mxu0
          %1239 = vmatprep.mubr.bf16.mxu0 0
          %1240 = vmatmul.mubr.bf16.gmra.mrb[0].mxu0 %v1095
          %v1241 = vpop.f32.mrb[0].mxu0
          %v1242 = vadd.f32 %v1029, %v1241
          %v1243 = vpop.f32.mrb[0].mxu0
          %v1244 = vpop.f32.mrb[0].mxu0
          %v1245 = vadd.f32 %v1029, %v1244
          %v1246 = vpop.f32.mrb[0].mxu0
          %1247 = vmatprep.mubr.bf16.mxu0 0
          %1248 = vmatmul.mubr.bf16.gmra.mrb[0].mxu0 %v1098
          %v1249 = vpop.f32.mrb[0].mxu0
          %v1250 = vadd.f32 %v1029, %v1249
          %v1251 = vpop.f32.mrb[0].mxu0
          %v1252 = vpop.f32.mrb[0].mxu0
          %v1253 = vadd.f32 %v1029, %v1252
          %v1254 = vpop.f32.mrb[0].mxu0
          %1255 = vmatprep.mubr.bf16.mxu0 0
          %1256 = vmatmul.mubr.bf16.gmra.mrb[0].mxu0 %v1101
          %v1257 = vpop.f32.mrb[0].mxu0
          %v1258 = vadd.f32 %v1029, %v1257
          %v1259 = vpop.f32.mrb[0].mxu0
          %v1260 = vpop.f32.mrb[0].mxu0
          %v1261 = vadd.f32 %v1029, %v1260
          %v1262 = vpop.f32.mrb[0].mxu0
          %1263 = vdwg.mxu0
          %v1264 = vmul.f32 %v1138, %v1138
          %v1265 = vmul.f32 %v1141, %v1141
          %v1266 = vmul.f32 %v1146, %v1146
          %v1267 = vmul.f32 %v1149, %v1149
          %v1268 = vmul.f32 %v1154, %v1154
          %v1269 = vmul.f32 %v1157, %v1157
          %v1270 = vmul.f32 %v1162, %v1162
          %v1271 = vmul.f32 %v1165, %v1165
          %v1272 = vmul.f32 %v1170, %v1170
          %v1273 = vmul.f32 %v1173, %v1173
          %v1274 = vmul.f32 %v1178, %v1178
          %v1275 = vmul.f32 %v1181, %v1181
          %v1276 = vmul.f32 %v1186, %v1186
          %v1277 = vmul.f32 %v1189, %v1189
          %v1278 = vmul.f32 %v1194, %v1194
          %v1279 = vmul.f32 %v1197, %v1197
          %v1280 = vmul.f32 %v1202, %v1202
          %v1281 = vmul.f32 %v1205, %v1205
          %v1282 = vmul.f32 %v1210, %v1210
          %v1283 = vmul.f32 %v1213, %v1213
          %v1284 = vmul.f32 %v1218, %v1218
          %v1285 = vmul.f32 %v1221, %v1221
          %v1286 = vmul.f32 %v1226, %v1226
          %v1287 = vmul.f32 %v1229, %v1229
          %v1288 = vmul.f32 %v1234, %v1234
          %v1289 = vmul.f32 %v1237, %v1237
          %v1290 = vmul.f32 %v1242, %v1242
          %v1291 = vmul.f32 %v1245, %v1245
          %v1292 = vmul.f32 %v1250, %v1250
          %v1293 = vmul.f32 %v1253, %v1253
          %v1294 = vmul.f32 %v1258, %v1258
          %v1295 = vmul.f32 %v1261, %v1261
          %1296 = vadd.xlane.f32.xlu0 %v1264
          %v1297 = vpop.xlane.xlu0 %1296
          %1298 = vadd.xlane.f32.xlu0 %v1265
          %v1299 = vpop.xlane.xlu0 %1298
          %1300 = vadd.xlane.f32.xlu0 %v1266
          %v1301 = vpop.xlane.xlu0 %1300
          %1302 = vadd.xlane.f32.xlu0 %v1267
          %v1303 = vpop.xlane.xlu0 %1302
          %1304 = vadd.xlane.f32.xlu0 %v1268
          %v1305 = vpop.xlane.xlu0 %1304
          %1306 = vadd.xlane.f32.xlu0 %v1269
          %v1307 = vpop.xlane.xlu0 %1306
          %1308 = vadd.xlane.f32.xlu0 %v1270
          %v1309 = vpop.xlane.xlu0 %1308
          %1310 = vadd.xlane.f32.xlu0 %v1271
          %v1311 = vpop.xlane.xlu0 %1310
          %1312 = vadd.xlane.f32.xlu0 %v1272
          %v1313 = vpop.xlane.xlu0 %1312
          %1314 = vadd.xlane.f32.xlu0 %v1273
          %v1315 = vpop.xlane.xlu0 %1314
          %1316 = vadd.xlane.f32.xlu0 %v1274
          %v1317 = vpop.xlane.xlu0 %1316
          %1318 = vadd.xlane.f32.xlu0 %v1275
          %v1319 = vpop.xlane.xlu0 %1318
          %1320 = vadd.xlane.f32.xlu0 %v1276
          %v1321 = vpop.xlane.xlu0 %1320
          %1322 = vadd.xlane.f32.xlu0 %v1277
          %v1323 = vpop.xlane.xlu0 %1322
          %1324 = vadd.xlane.f32.xlu0 %v1278
          %v1325 = vpop.xlane.xlu0 %1324
          %1326 = vadd.xlane.f32.xlu0 %v1279
          %v1327 = vpop.xlane.xlu0 %1326
          %1328 = vadd.xlane.f32.xlu0 %v1280
          %v1329 = vpop.xlane.xlu0 %1328
          %1330 = vadd.xlane.f32.xlu0 %v1281
          %v1331 = vpop.xlane.xlu0 %1330
          %1332 = vadd.xlane.f32.xlu0 %v1282
          %v1333 = vpop.xlane.xlu0 %1332
          %1334 = vadd.xlane.f32.xlu0 %v1283
          %v1335 = vpop.xlane.xlu0 %1334
          %1336 = vadd.xlane.f32.xlu0 %v1284
          %v1337 = vpop.xlane.xlu0 %1336
          %1338 = vadd.xlane.f32.xlu0 %v1285
          %v1339 = vpop.xlane.xlu0 %1338
          %1340 = vadd.xlane.f32.xlu0 %v1286
          %v1341 = vpop.xlane.xlu0 %1340
          %1342 = vadd.xlane.f32.xlu0 %v1287
          %v1343 = vpop.xlane.xlu0 %1342
          %1344 = vadd.xlane.f32.xlu0 %v1288
          %v1345 = vpop.xlane.xlu0 %1344
          %1346 = vadd.xlane.f32.xlu0 %v1289
          %v1347 = vpop.xlane.xlu0 %1346
          %1348 = vadd.xlane.f32.xlu0 %v1290
          %v1349 = vpop.xlane.xlu0 %1348
          %1350 = vadd.xlane.f32.xlu0 %v1291
          %v1351 = vpop.xlane.xlu0 %1350
          %1352 = vadd.xlane.f32.xlu0 %v1292
          %v1353 = vpop.xlane.xlu0 %1352
          %1354 = vadd.xlane.f32.xlu0 %v1293
          %v1355 = vpop.xlane.xlu0 %1354
          %1356 = vadd.xlane.f32.xlu0 %v1294
          %v1357 = vpop.xlane.xlu0 %1356
          %1358 = vadd.xlane.f32.xlu0 %v1295
          %v1359 = vpop.xlane.xlu0 %1358
          %v1360 = vadd.f32 %v1297, 1e-12
          %v1361 = vadd.f32 %v1299, 1e-12
          %v1362 = vadd.f32 %v1301, 1e-12
          %v1363 = vadd.f32 %v1303, 1e-12
          %v1364 = vadd.f32 %v1305, 1e-12
          %v1365 = vadd.f32 %v1307, 1e-12
          %v1366 = vadd.f32 %v1309, 1e-12
          %v1367 = vadd.f32 %v1311, 1e-12
          %v1368 = vadd.f32 %v1313, 1e-12
          %v1369 = vadd.f32 %v1315, 1e-12
          %v1370 = vadd.f32 %v1317, 1e-12
          %v1371 = vadd.f32 %v1319, 1e-12
          %v1372 = vadd.f32 %v1321, 1e-12
          %v1373 = vadd.f32 %v1323, 1e-12
          %v1374 = vadd.f32 %v1325, 1e-12
          %v1375 = vadd.f32 %v1327, 1e-12
          %v1376 = vadd.f32 %v1329, 1e-12
          %v1377 = vadd.f32 %v1331, 1e-12
          %v1378 = vadd.f32 %v1333, 1e-12
          %v1379 = vadd.f32 %v1335, 1e-12
          %v1380 = vadd.f32 %v1337, 1e-12
          %v1381 = vadd.f32 %v1339, 1e-12
          %v1382 = vadd.f32 %v1341, 1e-12
          %v1383 = vadd.f32 %v1343, 1e-12
          %v1384 = vadd.f32 %v1345, 1e-12
          %v1385 = vadd.f32 %v1347, 1e-12
          %v1386 = vadd.f32 %v1349, 1e-12
          %v1387 = vadd.f32 %v1351, 1e-12
          %v1388 = vadd.f32 %v1353, 1e-12
          %v1389 = vadd.f32 %v1355, 1e-12
          %v1390 = vadd.f32 %v1357, 1e-12
          %v1391 = vadd.f32 %v1359, 1e-12
          %v1392 = vrsqrt.pop %v1360
          %v1393 = vrsqrt.pop %v1361
          %v1394 = vrsqrt.pop %v1362
          %v1395 = vrsqrt.pop %v1363
          %v1396 = vrsqrt.pop %v1364
          %v1397 = vrsqrt.pop %v1365
          %v1398 = vrsqrt.pop %v1366
          %v1399 = vrsqrt.pop %v1367
          %v1400 = vrsqrt.pop %v1368
          %v1401 = vrsqrt.pop %v1369
          %v1402 = vrsqrt.pop %v1370
          %v1403 = vrsqrt.pop %v1371
          %v1404 = vrsqrt.pop %v1372
          %v1405 = vrsqrt.pop %v1373
          %v1406 = vrsqrt.pop %v1374
          %v1407 = vrsqrt.pop %v1375
          %v1408 = vrsqrt.pop %v1376
          %v1409 = vrsqrt.pop %v1377
          %v1410 = vrsqrt.pop %v1378
          %v1411 = vrsqrt.pop %v1379
          %v1412 = vrsqrt.pop %v1380
          %v1413 = vrsqrt.pop %v1381
          %v1414 = vrsqrt.pop %v1382
          %v1415 = vrsqrt.pop %v1383
          %v1416 = vrsqrt.pop %v1384
          %v1417 = vrsqrt.pop %v1385
          %v1418 = vrsqrt.pop %v1386
          %v1419 = vrsqrt.pop %v1387
          %v1420 = vrsqrt.pop %v1388
          %v1421 = vrsqrt.pop %v1389
          %v1422 = vrsqrt.pop %v1390
          %v1423 = vrsqrt.pop %v1391
          %v1424 = vmul.f32 %v1138, %v1392
          %v1425 = vmul.f32 %v1141, %v1393
          %v1426 = vmul.f32 %v1146, %v1394
          %v1427 = vmul.f32 %v1149, %v1395
          %v1428 = vmul.f32 %v1154, %v1396
          %v1429 = vmul.f32 %v1157, %v1397
          %v1430 = vmul.f32 %v1162, %v1398
          %v1431 = vmul.f32 %v1165, %v1399
          %v1432 = vmul.f32 %v1170, %v1400
          %v1433 = vmul.f32 %v1173, %v1401
          %v1434 = vmul.f32 %v1178, %v1402
          %v1435 = vmul.f32 %v1181, %v1403
          %v1436 = vmul.f32 %v1186, %v1404
          %v1437 = vmul.f32 %v1189, %v1405
          %v1438 = vmul.f32 %v1194, %v1406
          %v1439 = vmul.f32 %v1197, %v1407
          %v1440 = vmul.f32 %v1202, %v1408
          %v1441 = vmul.f32 %v1205, %v1409
          %v1442 = vmul.f32 %v1210, %v1410
          %v1443 = vmul.f32 %v1213, %v1411
          %v1444 = vmul.f32 %v1218, %v1412
          %v1445 = vmul.f32 %v1221, %v1413
          %v1446 = vmul.f32 %v1226, %v1414
          %v1447 = vmul.f32 %v1229, %v1415
          %v1448 = vmul.f32 %v1234, %v1416
          %v1449 = vmul.f32 %v1237, %v1417
          %v1450 = vmul.f32 %v1242, %v1418
          %v1451 = vmul.f32 %v1245, %v1419
          %v1452 = vmul.f32 %v1250, %v1420
          %v1453 = vmul.f32 %v1253, %v1421
          %v1454 = vmul.f32 %v1258, %v1422
          %v1455 = vmul.f32 %v1261, %v1423
          %1456 = vst [vmem:[%s319] sm:$0xff] %v1424
          %1457 = vst [vmem:[%s319 + $0x8] sm:$0xff] %v1425
          %1458 = vst [vmem:[%s319 + $0x10] sm:$0xff] %v1426
          %1459 = vst [vmem:[%s319 + $0x18] sm:$0xff] %v1427
          %1460 = vst [vmem:[%s319 + $0x20] sm:$0xff] %v1428
          %1461 = vst [vmem:[%s319 + $0x28] sm:$0xff] %v1429
          %1462 = vst [vmem:[%s319 + $0x30] sm:$0xff] %v1430
          %1463 = vst [vmem:[%s319 + $0x38] sm:$0xff] %v1431
          %1464 = vst [vmem:[%s319 + $0x40] sm:$0xff] %v1432
          %1465 = vst [vmem:[%s319 + $0x48] sm:$0xff] %v1433
          %1466 = vst [vmem:[%s319 + $0x50] sm:$0xff] %v1434
          %1467 = vst [vmem:[%s319 + $0x58] sm:$0xff] %v1435
          %1468 = vst [vmem:[%s319 + $0x60] sm:$0xff] %v1436
          %1469 = vst [vmem:[%s319 + $0x68] sm:$0xff] %v1437
          %1470 = vst [vmem:[%s319 + $0x70] sm:$0xff] %v1438
          %1471 = vst [vmem:[%s319 + $0x78] sm:$0xff] %v1439
          %1472 = vst [vmem:[%s319 + $0x80] sm:$0xff] %v1440
          %1473 = vst [vmem:[%s319 + $0x88] sm:$0xff] %v1441
          %1474 = vst [vmem:[%s319 + $0x90] sm:$0xff] %v1442
          %1475 = vst [vmem:[%s319 + $0x98] sm:$0xff] %v1443
          %1476 = vst [vmem:[%s319 + $0xa0] sm:$0xff] %v1444
          %1477 = vst [vmem:[%s319 + $0xa8] sm:$0xff] %v1445
          %1478 = vst [vmem:[%s319 + $0xb0] sm:$0xff] %v1446
          %1479 = vst [vmem:[%s319 + $0xb8] sm:$0xff] %v1447
          %1480 = vst [vmem:[%s319 + $0xc0] sm:$0xff] %v1448
          %1481 = vst [vmem:[%s319 + $0xc8] sm:$0xff] %v1449
          %1482 = vst [vmem:[%s319 + $0xd0] sm:$0xff] %v1450
          %1483 = vst [vmem:[%s319 + $0xd8] sm:$0xff] %v1451
          %1484 = vst [vmem:[%s319 + $0xe0] sm:$0xff] %v1452
          %1485 = vst [vmem:[%s319 + $0xe8] sm:$0xff] %v1453
          %1486 = vst [vmem:[%s319 + $0xf0] sm:$0xff] %v1454
          %1487 = vst [vmem:[%s319 + $0xf8] sm:$0xff] %v1455
          %v1488 = vpack.c.bf16 %v1425, %v1424
          %v1489 = vpack.c.bf16 %v1427, %v1426
          %v1490 = vpack.c.bf16 %v1429, %v1428
          %v1491 = vpack.c.bf16 %v1431, %v1430
          %v1492 = vpack.c.bf16 %v1433, %v1432
          %v1493 = vpack.c.bf16 %v1435, %v1434
          %v1494 = vpack.c.bf16 %v1437, %v1436
          %v1495 = vpack.c.bf16 %v1439, %v1438
          %v1496 = vpack.c.bf16 %v1441, %v1440
          %v1497 = vpack.c.bf16 %v1443, %v1442
          %v1498 = vpack.c.bf16 %v1445, %v1444
          %v1499 = vpack.c.bf16 %v1447, %v1446
          %v1500 = vpack.c.bf16 %v1449, %v1448
          %v1501 = vpack.c.bf16 %v1451, %v1450
          %v1502 = vpack.c.bf16 %v1453, %v1452
          %v1503 = vpack.c.bf16 %v1455, %v1454
          %v1520 = vunpack.c.l.b16 %v1488
          %v1521 = vunpack.c.h.b16 %v1488
          %v1522 = vunpack.c.l.b16 %v1489
          %v1523 = vunpack.c.h.b16 %v1489
          %v1524 = vunpack.c.l.b16 %v1490
          %v1525 = vunpack.c.h.b16 %v1490
          %v1526 = vunpack.c.l.b16 %v1491
          %v1527 = vunpack.c.h.b16 %v1491
          %v1528 = vunpack.c.l.b16 %v1492
          %v1529 = vunpack.c.h.b16 %v1492
          %v1530 = vunpack.c.l.b16 %v1493
          %v1531 = vunpack.c.h.b16 %v1493
          %v1532 = vunpack.c.l.b16 %v1494
          %v1533 = vunpack.c.h.b16 %v1494
          %v1534 = vunpack.c.l.b16 %v1495
          %v1535 = vunpack.c.h.b16 %v1495
          %v1536 = vunpack.c.l.b16 %v1496
          %v1537 = vunpack.c.h.b16 %v1496
          %v1538 = vunpack.c.l.b16 %v1497
          %v1539 = vunpack.c.h.b16 %v1497
          %v1540 = vunpack.c.l.b16 %v1498
          %v1541 = vunpack.c.h.b16 %v1498
          %v1542 = vunpack.c.l.b16 %v1499
          %v1543 = vunpack.c.h.b16 %v1499
          %v1544 = vunpack.c.l.b16 %v1500
          %v1545 = vunpack.c.h.b16 %v1500
          %v1546 = vunpack.c.l.b16 %v1501
          %v1547 = vunpack.c.h.b16 %v1501
          %v1548 = vunpack.c.l.b16 %v1502
          %v1549 = vunpack.c.h.b16 %v1502
          %v1550 = vunpack.c.l.b16 %v1503
          %v1551 = vunpack.c.h.b16 %v1503
          %v1552 = vpack.c.b16 %v1520, %v1520
          %v1553 = vpack.c.b16 %v1521, %v1521
          %v1554 = vpack.c.b16 %v1522, %v1522
          %v1555 = vpack.c.b16 %v1523, %v1523
          %v1556 = vpack.c.b16 %v1524, %v1524
          %v1557 = vpack.c.b16 %v1525, %v1525
          %v1558 = vpack.c.b16 %v1526, %v1526
          %v1559 = vpack.c.b16 %v1527, %v1527
          %v1560 = vpack.c.b16 %v1528, %v1528
          %v1561 = vpack.c.b16 %v1529, %v1529
          %v1562 = vpack.c.b16 %v1530, %v1530
          %v1563 = vpack.c.b16 %v1531, %v1531
          %v1564 = vpack.c.b16 %v1532, %v1532
          %v1565 = vpack.c.b16 %v1533, %v1533
          %v1566 = vpack.c.b16 %v1534, %v1534
          %v1567 = vpack.c.b16 %v1535, %v1535
          %v1568 = vpack.c.b16 %v1536, %v1536
          %v1569 = vpack.c.b16 %v1537, %v1537
          %v1570 = vpack.c.b16 %v1538, %v1538
          %v1571 = vpack.c.b16 %v1539, %v1539
          %v1572 = vpack.c.b16 %v1540, %v1540
          %v1573 = vpack.c.b16 %v1541, %v1541
          %v1574 = vpack.c.b16 %v1542, %v1542
          %v1575 = vpack.c.b16 %v1543, %v1543
          %v1576 = vpack.c.b16 %v1544, %v1544
          %v1577 = vpack.c.b16 %v1545, %v1545
          %v1578 = vpack.c.b16 %v1546, %v1546
          %v1579 = vpack.c.b16 %v1547, %v1547
          %v1580 = vpack.c.b16 %v1548, %v1548
          %v1581 = vpack.c.b16 %v1549, %v1549
          %v1582 = vpack.c.b16 %v1550, %v1550
          %v1583 = vpack.c.b16 %v1551, %v1551
          %1616 = vst [vmem:[%s326] sm:$0xf] %v1552
          %1617 = vst [vmem:[%s326 + $0x4] sm:$0xf] %v1553
          %1618 = vst [vmem:[%s326 + $0x8] sm:$0xf] %v1554
          %1619 = vst [vmem:[%s326 + $0xc] sm:$0xf] %v1555
          %1620 = vst [vmem:[%s326 + $0x10] sm:$0xf] %v1556
          %1621 = vst [vmem:[%s326 + $0x14] sm:$0xf] %v1557
          %1622 = vst [vmem:[%s326 + $0x18] sm:$0xf] %v1558
          %1623 = vst [vmem:[%s326 + $0x1c] sm:$0xf] %v1559
          %1624 = vst [vmem:[%s326 + $0x20] sm:$0xf] %v1560
          %1625 = vst [vmem:[%s326 + $0x24] sm:$0xf] %v1561
          %1626 = vst [vmem:[%s326 + $0x28] sm:$0xf] %v1562
          %1627 = vst [vmem:[%s326 + $0x2c] sm:$0xf] %v1563
          %1628 = vst [vmem:[%s326 + $0x30] sm:$0xf] %v1564
          %1629 = vst [vmem:[%s326 + $0x34] sm:$0xf] %v1565
          %1630 = vst [vmem:[%s326 + $0x38] sm:$0xf] %v1566
          %1631 = vst [vmem:[%s326 + $0x3c] sm:$0xf] %v1567
          %1632 = vst [vmem:[%s326 + $0x40] sm:$0xf] %v1568
          %1633 = vst [vmem:[%s326 + $0x44] sm:$0xf] %v1569
          %1634 = vst [vmem:[%s326 + $0x48] sm:$0xf] %v1570
          %1635 = vst [vmem:[%s326 + $0x4c] sm:$0xf] %v1571
          %1636 = vst [vmem:[%s326 + $0x50] sm:$0xf] %v1572
          %1637 = vst [vmem:[%s326 + $0x54] sm:$0xf] %v1573
          %1638 = vst [vmem:[%s326 + $0x58] sm:$0xf] %v1574
          %1639 = vst [vmem:[%s326 + $0x5c] sm:$0xf] %v1575
          %1640 = vst [vmem:[%s326 + $0x60] sm:$0xf] %v1576
          %1641 = vst [vmem:[%s326 + $0x64] sm:$0xf] %v1577
          %1642 = vst [vmem:[%s326 + $0x68] sm:$0xf] %v1578
          %1643 = vst [vmem:[%s326 + $0x6c] sm:$0xf] %v1579
          %1644 = vst [vmem:[%s326 + $0x70] sm:$0xf] %v1580
          %1645 = vst [vmem:[%s326 + $0x74] sm:$0xf] %v1581
          %1646 = vst [vmem:[%s326 + $0x78] sm:$0xf] %v1582
          %1647 = vst [vmem:[%s326 + $0x7c] sm:$0xf] %v1583
        $region48: #{tpu_custom_call.1} parent=35 // pred_fallthru
          _
        %s1648 = sand.u32 %s163, 1
        %s1649 = scalar_lea.sflag [#allocation5], %s1648
        %s1650 = sand.u32 %s163, 1
        %s1651 = smul.addr %s1650, 256
        %s1652 = scalar_lea.vmem [#allocation6], %s1651
        %s1653 = sand.u32 %s191, 1
        %s1654 = scalar_lea.sflag [#allocation8], %s1653
        %s1655 = sand.u32 %s191, 1
        %s1656 = smul.addr %s1655, 128
        %s1657 = scalar_lea.vmem [#allocation7], %s1656
        // Predicated region
        $region49: #{tpu_custom_call.1} parent=35 // pred_check
          %p1658 = pneg %p173
        $region50: #{tpu_custom_call.1} parent=35 // pred_check_branch
          %1660 = sbr.rel (%p1658) target = $region52
        $region51: #{tpu_custom_call.1} parent=35 // pred_region
          %s1661 = smul.u32 32, %s32
          %s1663 = ssub.s32 4096, 4096
          %1664 = vsyncadd %s1649, %s1663
          %s1665 = smul.addr %s1661, 2
          %s1666 = sadd.s32 %s31, %s1665
          %s1667 = smul.addr %s1666, 128
          %s1668 = scalar_lea.hbm %s4, %s1667
          %s1669 = sshll.u32 %s1652, 4
          %s1670 = int_to_ptr.vmem [resolvable:$true] %s1669
          %1675 = dma.vmem_to_hbm [thread:$0]  %s1670, 4096, %s1668, %s1649, 128, 256, 8
        $region52: #{tpu_custom_call.1} parent=35 // pred_fallthru
          _
        // Predicated region
        $region53: #{tpu_custom_call.1} parent=35 // pred_check
          %p1676 = pneg %p201
        $region54: #{tpu_custom_call.1} parent=35 // pred_check_branch
          %1678 = sbr.rel (%p1676) target = $region56
        $region55: #{tpu_custom_call.1} parent=35 // pred_region
          %s1679 = smul.u32 32, %s32
          %s1681 = ssub.s32 2048, 2048
          %1682 = vsyncadd %s1654, %s1681
          %s1683 = smul.addr %s1679, 2
          %s1684 = sadd.s32 %s31, %s1683
          %s1685 = smul.addr %s1684, 64
          %s1686 = scalar_lea.hbm %s5, %s1685
          %s1687 = sshll.u32 %s1657, 4
          %s1688 = int_to_ptr.vmem [resolvable:$true] %s1687
          %1693 = dma.vmem_to_hbm [thread:$0]  %s1688, 2048, %s1686, %s1654, 64, 128, 4
        $region56: #{tpu_custom_call.1} parent=35 // pred_fallthru
          _
      $region36: #{tpu_custom_call.1} parent=5 // pred_fallthru
        _
      %p1694 = scmp.le.s32.totalorder 2, %s21
      // Predicated region
      $region57: #{tpu_custom_call.1} parent=5 // pred_check
        %p1695 = pneg %p1694
      $region58: #{tpu_custom_call.1} parent=5 // pred_check_branch
        %1697 = sbr.rel (%p1695) target = $region60
      $region59: #{tpu_custom_call.1} parent=5 // pred_region
        %s1698 = ssub.s32 %s21, 2
        // Predicated region
        $region61: #{tpu_custom_call.1} parent=59 // pred_check
          %p1699 = pneg %p179
        $region62: #{tpu_custom_call.1} parent=59 // pred_check_branch
          %1701 = sbr.rel (%p1699) target = $region64
        $region63: #{tpu_custom_call.1} parent=59 // pred_region
          %s1702 = sand.u32 %s164, 1
          %s1703 = scalar_lea.sflag [#allocation5], %s1702
          %s1704 = sand.u32 %s164, 1
          %s1705 = smul.addr %s1704, 256
          %s1706 = scalar_lea.vmem [#allocation6], %s1705
          %1707 = dma.done %s1703, 4096
        $region64: #{tpu_custom_call.1} parent=59 // pred_fallthru
          _
        // Predicated region
        $region65: #{tpu_custom_call.1} parent=59 // pred_check
          %p1708 = pneg %p207
        $region66: #{tpu_custom_call.1} parent=59 // pred_check_branch
          %1710 = sbr.rel (%p1708) target = $region68
        $region67: #{tpu_custom_call.1} parent=59 // pred_region
          %s1711 = sand.u32 %s192, 1
          %s1712 = scalar_lea.sflag [#allocation8], %s1711
          %s1713 = sand.u32 %s192, 1
          %s1714 = smul.addr %s1713, 128
          %s1715 = scalar_lea.vmem [#allocation7], %s1714
          %1716 = dma.done %s1712, 2048
        $region68: #{tpu_custom_call.1} parent=59 // pred_fallthru
          _
      $region60: #{tpu_custom_call.1} parent=5 // pred_fallthru
        _
    $region6: #{tpu_custom_call.1} parent=1 // loop_footer
      %s25 = sadd.s32 1, %s21
    $region7: #{tpu_custom_call.1} parent=1 // loop_footer_branch
      %20 = sbr.rel target = $region3
    $region8: #{tpu_custom_call.1} parent=1 // loop_exit
      _
    %1717 = vsyncpa [#allocation4], 1
    %s1718 = scalar_lea.sflag [#allocation4], 1
    %1719 = vsyncpa %s1718, 1
    %1720 = vsyncpa [#allocation5], 1
    %s1721 = scalar_lea.sflag [#allocation5], 1
    %1722 = vsyncpa %s1721, 1
    %1723 = vsyncpa [#allocation8], 1
    %s1724 = scalar_lea.sflag [#allocation8], 1
    %1725 = vsyncpa %s1724, 1

</llo_original>
